<compile_context>
chip_gen: v7x
topology: tpu7x:2x2x1
jax: 0.10.0
libtpu: 0.0.40
codegen_flags: <defaults>
</compile_context>

<pallas_src>
import functools

import jax
import jax.numpy as jnp
from jax.experimental import pallas as pl
from jax.experimental.pallas import tpu as pltpu


# ----------------------------------------------------------------------------
# Pallas kernel
# ----------------------------------------------------------------------------
def _circ_conv3d_kernel(w_ref, x_ref, o_ref, *, bblk, dims):
    """Circular 3x3x3 stencil on an aligned (Bblk, D, H, W) block.

    w_ref : (27,) f32 taps in SMEM (scalar reads), flattened as K[a, b, c]
    x_ref : (Bblk, D, H, W) activation block in VMEM (no padding anywhere)
    o_ref : (Bblk, D, H, W)
    """
    D, H, W = dims
    # Read all taps once (scalar SMEM loads hoisted above the unrolled loops).
    wv = [w_ref[t] for t in range(27)]

    for i in range(bblk):
        accs = [None] * D
        for p in range(D):                      # input depth plane (unpadded)
            base = x_ref[i, p]                  # (H, W) f32, one aligned plane
            for c in range(3):                  # W (lane) tap -> circular shift 1-c
                sw = (1 - c) % W
                xc = base if sw == 0 else pltpu.roll(base, sw, axis=1)
                for b in range(3):              # H (sublane) tap -> circular shift 1-b
                    sh = (1 - b) % H
                    xbc = xc if sh == 0 else pltpu.roll(xc, sh, axis=0)
                    for a in range(3):          # D tap -> static circular index
                        d = (p + 1 - a) % D     # output plane this contributes to
                        t = (a * 3 + b) * 3 + c
                        contrib = wv[t] * xbc
                        accs[d] = contrib if accs[d] is None else accs[d] + contrib
        for d in range(D):
            o_ref[i, d] = accs[d].astype(o_ref.dtype)


# ----------------------------------------------------------------------------
# Wrapper (mirrors kernel_diff.forward)
# ----------------------------------------------------------------------------
def circular_conv3d(x, kernel):
    """x: (B, 1, D, H, W); kernel: (3, 3, 3).

    Equivalent to:  F.conv3d(F.pad(x, (1,)*6, 'circular'),
                             kernel.reshape(1, 1, 3, 3, 3), padding='valid')
    """
    B, C, D, H, W = x.shape
    assert C == 1, "kernel_diff reshapes the kernel to (1,1,k,k,k) -> Cin must be 1"
    assert kernel.shape == (3, 3, 3), "kernel_diff pads by 1 -> 3x3x3 stencil"

    xb = x[:, 0].astype(jnp.float32)            # (B, D, H, W): last two dims stay aligned
    w_flat = kernel.reshape(-1).astype(jnp.float32)

    # Pick the batch block: biggest block under a modest VMEM budget, but keep at
    # least 2 grid steps (so v7x's second TensorCore gets work), dividing B evenly.
    per_batch_bytes = D * H * W * 4
    bblk = max(1, min(B, (4 << 20) // max(per_batch_bytes, 1)))
    if bblk >= B and B > 1:
        bblk = (B + 1) // 2
    while B % bblk:
        bblk -= 1
    grid = (B // bblk,)

    y = pl.pallas_call(
        functools.partial(_circ_conv3d_kernel, bblk=bblk, dims=(D, H, W)),
        out_shape=jax.ShapeDtypeStruct((B, D, H, W), jnp.float32),
        grid=grid,
        in_specs=[
            pl.BlockSpec(memory_space=pltpu.MemorySpace.SMEM),           # 27 taps
            pl.BlockSpec((bblk, D, H, W), lambda i: (i, 0, 0, 0)),       # activation
        ],
        out_specs=pl.BlockSpec((bblk, D, H, W), lambda i: (i, 0, 0, 0)),
        compiler_params=pltpu.CompilerParams(
            dimension_semantics=("parallel",)),
    )(w_flat, xb)
    return y[:, None]                            # (B, 1, D, H, W)


# ----------------------------------------------------------------------------
# Pure-JAX reference (independent path: wrap-pad + lax.conv) for self-checking
# ----------------------------------------------------------------------------
def reference_forward(x, kernel):
    xp = jnp.pad(x.astype(jnp.float32),
                 ((0, 0), (0, 0), (1, 1), (1, 1), (1, 1)), mode="wrap")
    w = kernel.reshape(1, 1, *kernel.shape).astype(jnp.float32)
    return jax.lax.conv_general_dilated(
        xp, w, window_strides=(1, 1, 1), padding="VALID",
        dimension_numbers=("NCDHW", "OIDHW", "NCDHW"),
        precision=jax.lax.Precision.HIGHEST)


# ----------------------------------------------------------------------------
# main
# ----------------------------------------------------------------------------
if __name__ == "__main__":
    key = jax.random.PRNGKey(0)
    k_x, k_w = jax.random.split(key)

    # Small but lane/sublane-dense shape: (H, W) = (8, 128) keeps every load,
    # roll and store on whole, unmasked vregs.
    B, C, D, H, W = 2, 1, 8, 8, 128
    x = jax.random.normal(k_x, (B, C, D, H, W), dtype=jnp.float32)
    kernel = jax.random.normal(k_w, (3, 3, 3), dtype=jnp.float32)

    fwd = jax.jit(circular_conv3d)
    y = jax.block_until_ready(fwd(x, kernel))
    assert y.shape == (B, 1, D, H, W), y.shape

    y_ref = jax.block_until_ready(jax.jit(reference_forward)(x, kernel))
    err = float(jnp.max(jnp.abs(y - y_ref)))
    scale = float(jnp.max(jnp.abs(y_ref))) + 1e-6
    assert err <= 1e-3 * scale + 1e-5, f"mismatch: max_abs_err={err}, scale={scale}"

    print("KERNEL_OK")
</pallas_src>

<mosaic_0001>
module attributes {stable_mosaic.version = 11 : i64} {
  func.func @_circ_conv3d_kernel(%arg0: i32, %arg1: memref<27xf32, #tpu.memory_space<smem>>, %arg2: memref<1x8x8x128xf32, #tpu.memory_space<vmem>>, %arg3: memref<1x8x8x128xf32, #tpu.memory_space<vmem>>) attributes {dimension_semantics = [#tpu.dimension_semantics<parallel>], iteration_bounds = array<i64: 2>, scalar_prefetch = 0 : i64, scratch_operands = 0 : i64, tpu.core_type = #tpu.core_type<tc>, window_params = [{transform_indices = @transform_0, window_bounds = array<i64: 27>}, {transform_indices = @transform_1, window_bounds = array<i64: 1, 8, 8, 128>}, {transform_indices = @transform_2, window_bounds = array<i64: 1, 8, 8, 128>}]} {
    %c0 = arith.constant 0 : index
    %0 = memref.load %arg1[%c0] : memref<27xf32, #tpu.memory_space<smem>>
    %c1 = arith.constant 1 : index
    %1 = memref.load %arg1[%c1] : memref<27xf32, #tpu.memory_space<smem>>
    %c2 = arith.constant 2 : index
    %2 = memref.load %arg1[%c2] : memref<27xf32, #tpu.memory_space<smem>>
    %c3 = arith.constant 3 : index
    %3 = memref.load %arg1[%c3] : memref<27xf32, #tpu.memory_space<smem>>
    %c4 = arith.constant 4 : index
    %4 = memref.load %arg1[%c4] : memref<27xf32, #tpu.memory_space<smem>>
    %c5 = arith.constant 5 : index
    %5 = memref.load %arg1[%c5] : memref<27xf32, #tpu.memory_space<smem>>
    %c6 = arith.constant 6 : index
    %6 = memref.load %arg1[%c6] : memref<27xf32, #tpu.memory_space<smem>>
    %c7 = arith.constant 7 : index
    %7 = memref.load %arg1[%c7] : memref<27xf32, #tpu.memory_space<smem>>
    %c8 = arith.constant 8 : index
    %8 = memref.load %arg1[%c8] : memref<27xf32, #tpu.memory_space<smem>>
    %c9 = arith.constant 9 : index
    %9 = memref.load %arg1[%c9] : memref<27xf32, #tpu.memory_space<smem>>
    %c10 = arith.constant 10 : index
    %10 = memref.load %arg1[%c10] : memref<27xf32, #tpu.memory_space<smem>>
    %c11 = arith.constant 11 : index
    %11 = memref.load %arg1[%c11] : memref<27xf32, #tpu.memory_space<smem>>
    %c12 = arith.constant 12 : index
    %12 = memref.load %arg1[%c12] : memref<27xf32, #tpu.memory_space<smem>>
    %c13 = arith.constant 13 : index
    %13 = memref.load %arg1[%c13] : memref<27xf32, #tpu.memory_space<smem>>
    %c14 = arith.constant 14 : index
    %14 = memref.load %arg1[%c14] : memref<27xf32, #tpu.memory_space<smem>>
    %c15 = arith.constant 15 : index
    %15 = memref.load %arg1[%c15] : memref<27xf32, #tpu.memory_space<smem>>
    %c16 = arith.constant 16 : index
    %16 = memref.load %arg1[%c16] : memref<27xf32, #tpu.memory_space<smem>>
    %c17 = arith.constant 17 : index
    %17 = memref.load %arg1[%c17] : memref<27xf32, #tpu.memory_space<smem>>
    %c18 = arith.constant 18 : index
    %18 = memref.load %arg1[%c18] : memref<27xf32, #tpu.memory_space<smem>>
    %c19 = arith.constant 19 : index
    %19 = memref.load %arg1[%c19] : memref<27xf32, #tpu.memory_space<smem>>
    %c20 = arith.constant 20 : index
    %20 = memref.load %arg1[%c20] : memref<27xf32, #tpu.memory_space<smem>>
    %c21 = arith.constant 21 : index
    %21 = memref.load %arg1[%c21] : memref<27xf32, #tpu.memory_space<smem>>
    %c22 = arith.constant 22 : index
    %22 = memref.load %arg1[%c22] : memref<27xf32, #tpu.memory_space<smem>>
    %c23 = arith.constant 23 : index
    %23 = memref.load %arg1[%c23] : memref<27xf32, #tpu.memory_space<smem>>
    %c24 = arith.constant 24 : index
    %24 = memref.load %arg1[%c24] : memref<27xf32, #tpu.memory_space<smem>>
    %c25 = arith.constant 25 : index
    %25 = memref.load %arg1[%c25] : memref<27xf32, #tpu.memory_space<smem>>
    %c26 = arith.constant 26 : index
    %26 = memref.load %arg1[%c26] : memref<27xf32, #tpu.memory_space<smem>>
    %c0_0 = arith.constant 0 : index
    %c0_1 = arith.constant 0 : index
    %c0_2 = arith.constant 0 : index
    %c0_3 = arith.constant 0 : index
    %27 = vector.load %arg2[%c0_0, %c0_1, %c0_2, %c0_3] : memref<1x8x8x128xf32, #tpu.memory_space<vmem>>, vector<1x1x8x128xf32>
    %28 = vector.shape_cast %27 : vector<1x1x8x128xf32> to vector<8x128xf32>
    %c1_i32 = arith.constant 1 : i32
    %29 = tpu.dynamic_rotate %28 by %c1_i32 dim 1 : vector<8x128xf32>, i32 -> vector<8x128xf32>
    %c1_i32_4 = arith.constant 1 : i32
    %30 = tpu.dynamic_rotate %29 by %c1_i32_4 dim 0 : vector<8x128xf32>, i32 -> vector<8x128xf32>
    %31 = vector.broadcast %0 : f32 to vector<8x128xf32>
    %32 = arith.mulf %31, %30 : vector<8x128xf32>
    %33 = vector.broadcast %9 : f32 to vector<8x128xf32>
    %34 = arith.mulf %33, %30 : vector<8x128xf32>
    %35 = vector.broadcast %18 : f32 to vector<8x128xf32>
    %36 = arith.mulf %35, %30 : vector<8x128xf32>
    %37 = vector.broadcast %3 : f32 to vector<8x128xf32>
    %38 = arith.mulf %37, %29 : vector<8x128xf32>
    %39 = arith.addf %32, %38 : vector<8x128xf32>
    %40 = vector.broadcast %12 : f32 to vector<8x128xf32>
    %41 = arith.mulf %40, %29 : vector<8x128xf32>
    %42 = arith.addf %34, %41 : vector<8x128xf32>
    %43 = vector.broadcast %21 : f32 to vector<8x128xf32>
    %44 = arith.mulf %43, %29 : vector<8x128xf32>
    %45 = arith.addf %36, %44 : vector<8x128xf32>
    %c7_i32 = arith.constant 7 : i32
    %46 = tpu.dynamic_rotate %29 by %c7_i32 dim 0 : vector<8x128xf32>, i32 -> vector<8x128xf32>
    %47 = vector.broadcast %6 : f32 to vector<8x128xf32>
    %48 = arith.mulf %47, %46 : vector<8x128xf32>
    %49 = arith.addf %39, %48 : vector<8x128xf32>
    %50 = vector.broadcast %15 : f32 to vector<8x128xf32>
    %51 = arith.mulf %50, %46 : vector<8x128xf32>
    %52 = arith.addf %42, %51 : vector<8x128xf32>
    %53 = vector.broadcast %24 : f32 to vector<8x128xf32>
    %54 = arith.mulf %53, %46 : vector<8x128xf32>
    %55 = arith.addf %45, %54 : vector<8x128xf32>
    %c1_i32_5 = arith.constant 1 : i32
    %56 = tpu.dynamic_rotate %28 by %c1_i32_5 dim 0 : vector<8x128xf32>, i32 -> vector<8x128xf32>
    %57 = vector.broadcast %1 : f32 to vector<8x128xf32>
    %58 = arith.mulf %57, %56 : vector<8x128xf32>
    %59 = arith.addf %49, %58 : vector<8x128xf32>
    %60 = vector.broadcast %10 : f32 to vector<8x128xf32>
    %61 = arith.mulf %60, %56 : vector<8x128xf32>
    %62 = arith.addf %52, %61 : vector<8x128xf32>
    %63 = vector.broadcast %19 : f32 to vector<8x128xf32>
    %64 = arith.mulf %63, %56 : vector<8x128xf32>
    %65 = arith.addf %55, %64 : vector<8x128xf32>
    %66 = vector.broadcast %4 : f32 to vector<8x128xf32>
    %67 = arith.mulf %66, %28 : vector<8x128xf32>
    %68 = arith.addf %59, %67 : vector<8x128xf32>
    %69 = vector.broadcast %13 : f32 to vector<8x128xf32>
    %70 = arith.mulf %69, %28 : vector<8x128xf32>
    %71 = arith.addf %62, %70 : vector<8x128xf32>
    %72 = vector.broadcast %22 : f32 to vector<8x128xf32>
    %73 = arith.mulf %72, %28 : vector<8x128xf32>
    %74 = arith.addf %65, %73 : vector<8x128xf32>
    %c7_i32_6 = arith.constant 7 : i32
    %75 = tpu.dynamic_rotate %28 by %c7_i32_6 dim 0 : vector<8x128xf32>, i32 -> vector<8x128xf32>
    %76 = vector.broadcast %7 : f32 to vector<8x128xf32>
    %77 = arith.mulf %76, %75 : vector<8x128xf32>
    %78 = arith.addf %68, %77 : vector<8x128xf32>
    %79 = vector.broadcast %16 : f32 to vector<8x128xf32>
    %80 = arith.mulf %79, %75 : vector<8x128xf32>
    %81 = arith.addf %71, %80 : vector<8x128xf32>
    %82 = vector.broadcast %25 : f32 to vector<8x128xf32>
    %83 = arith.mulf %82, %75 : vector<8x128xf32>
    %84 = arith.addf %74, %83 : vector<8x128xf32>
    %c127_i32 = arith.constant 127 : i32
    %85 = tpu.dynamic_rotate %28 by %c127_i32 dim 1 : vector<8x128xf32>, i32 -> vector<8x128xf32>
    %c1_i32_7 = arith.constant 1 : i32
    %86 = tpu.dynamic_rotate %85 by %c1_i32_7 dim 0 : vector<8x128xf32>, i32 -> vector<8x128xf32>
    %87 = vector.broadcast %2 : f32 to vector<8x128xf32>
    %88 = arith.mulf %87, %86 : vector<8x128xf32>
    %89 = arith.addf %78, %88 : vector<8x128xf32>
    %90 = vector.broadcast %11 : f32 to vector<8x128xf32>
    %91 = arith.mulf %90, %86 : vector<8x128xf32>
    %92 = arith.addf %81, %91 : vector<8x128xf32>
    %93 = vector.broadcast %20 : f32 to vector<8x128xf32>
    %94 = arith.mulf %93, %86 : vector<8x128xf32>
    %95 = arith.addf %84, %94 : vector<8x128xf32>
    %96 = vector.broadcast %5 : f32 to vector<8x128xf32>
    %97 = arith.mulf %96, %85 : vector<8x128xf32>
    %98 = arith.addf %89, %97 : vector<8x128xf32>
    %99 = vector.broadcast %14 : f32 to vector<8x128xf32>
    %100 = arith.mulf %99, %85 : vector<8x128xf32>
    %101 = arith.addf %92, %100 : vector<8x128xf32>
    %102 = vector.broadcast %23 : f32 to vector<8x128xf32>
    %103 = arith.mulf %102, %85 : vector<8x128xf32>
    %104 = arith.addf %95, %103 : vector<8x128xf32>
    %c7_i32_8 = arith.constant 7 : i32
    %105 = tpu.dynamic_rotate %85 by %c7_i32_8 dim 0 : vector<8x128xf32>, i32 -> vector<8x128xf32>
    %106 = vector.broadcast %8 : f32 to vector<8x128xf32>
    %107 = arith.mulf %106, %105 : vector<8x128xf32>
    %108 = arith.addf %98, %107 : vector<8x128xf32>
    %109 = vector.broadcast %17 : f32 to vector<8x128xf32>
    %110 = arith.mulf %109, %105 : vector<8x128xf32>
    %111 = arith.addf %101, %110 : vector<8x128xf32>
    %112 = vector.broadcast %26 : f32 to vector<8x128xf32>
    %113 = arith.mulf %112, %105 : vector<8x128xf32>
    %114 = arith.addf %104, %113 : vector<8x128xf32>
    %c0_9 = arith.constant 0 : index
    %c1_10 = arith.constant 1 : index
    %c0_11 = arith.constant 0 : index
    %c0_12 = arith.constant 0 : index
    %115 = vector.load %arg2[%c0_9, %c1_10, %c0_11, %c0_12] : memref<1x8x8x128xf32, #tpu.memory_space<vmem>>, vector<1x1x8x128xf32>
    %116 = vector.shape_cast %115 : vector<1x1x8x128xf32> to vector<8x128xf32>
    %c1_i32_13 = arith.constant 1 : i32
    %117 = tpu.dynamic_rotate %116 by %c1_i32_13 dim 1 : vector<8x128xf32>, i32 -> vector<8x128xf32>
    %c1_i32_14 = arith.constant 1 : i32
    %118 = tpu.dynamic_rotate %117 by %c1_i32_14 dim 0 : vector<8x128xf32>, i32 -> vector<8x128xf32>
    %119 = vector.broadcast %0 : f32 to vector<8x128xf32>
    %120 = arith.mulf %119, %118 : vector<8x128xf32>
    %121 = vector.broadcast %9 : f32 to vector<8x128xf32>
    %122 = arith.mulf %121, %118 : vector<8x128xf32>
    %123 = arith.addf %108, %122 : vector<8x128xf32>
    %124 = vector.broadcast %18 : f32 to vector<8x128xf32>
    %125 = arith.mulf %124, %118 : vector<8x128xf32>
    %126 = arith.addf %111, %125 : vector<8x128xf32>
    %127 = vector.broadcast %3 : f32 to vector<8x128xf32>
    %128 = arith.mulf %127, %117 : vector<8x128xf32>
    %129 = arith.addf %120, %128 : vector<8x128xf32>
    %130 = vector.broadcast %12 : f32 to vector<8x128xf32>
    %131 = arith.mulf %130, %117 : vector<8x128xf32>
    %132 = arith.addf %123, %131 : vector<8x128xf32>
    %133 = vector.broadcast %21 : f32 to vector<8x128xf32>
    %134 = arith.mulf %133, %117 : vector<8x128xf32>
    %135 = arith.addf %126, %134 : vector<8x128xf32>
    %c7_i32_15 = arith.constant 7 : i32
    %136 = tpu.dynamic_rotate %117 by %c7_i32_15 dim 0 : vector<8x128xf32>, i32 -> vector<8x128xf32>
    %137 = vector.broadcast %6 : f32 to vector<8x128xf32>
    %138 = arith.mulf %137, %136 : vector<8x128xf32>
    %139 = arith.addf %129, %138 : vector<8x128xf32>
    %140 = vector.broadcast %15 : f32 to vector<8x128xf32>
    %141 = arith.mulf %140, %136 : vector<8x128xf32>
    %142 = arith.addf %132, %141 : vector<8x128xf32>
    %143 = vector.broadcast %24 : f32 to vector<8x128xf32>
    %144 = arith.mulf %143, %136 : vector<8x128xf32>
    %145 = arith.addf %135, %144 : vector<8x128xf32>
    %c1_i32_16 = arith.constant 1 : i32
    %146 = tpu.dynamic_rotate %116 by %c1_i32_16 dim 0 : vector<8x128xf32>, i32 -> vector<8x128xf32>
    %147 = vector.broadcast %1 : f32 to vector<8x128xf32>
    %148 = arith.mulf %147, %146 : vector<8x128xf32>
    %149 = arith.addf %139, %148 : vector<8x128xf32>
    %150 = vector.broadcast %10 : f32 to vector<8x128xf32>
    %151 = arith.mulf %150, %146 : vector<8x128xf32>
    %152 = arith.addf %142, %151 : vector<8x128xf32>
    %153 = vector.broadcast %19 : f32 to vector<8x128xf32>
    %154 = arith.mulf %153, %146 : vector<8x128xf32>
    %155 = arith.addf %145, %154 : vector<8x128xf32>
    %156 = vector.broadcast %4 : f32 to vector<8x128xf32>
    %157 = arith.mulf %156, %116 : vector<8x128xf32>
    %158 = arith.addf %149, %157 : vector<8x128xf32>
    %159 = vector.broadcast %13 : f32 to vector<8x128xf32>
    %160 = arith.mulf %159, %116 : vector<8x128xf32>
    %161 = arith.addf %152, %160 : vector<8x128xf32>
    %162 = vector.broadcast %22 : f32 to vector<8x128xf32>
    %163 = arith.mulf %162, %116 : vector<8x128xf32>
    %164 = arith.addf %155, %163 : vector<8x128xf32>
    %c7_i32_17 = arith.constant 7 : i32
    %165 = tpu.dynamic_rotate %116 by %c7_i32_17 dim 0 : vector<8x128xf32>, i32 -> vector<8x128xf32>
    %166 = vector.broadcast %7 : f32 to vector<8x128xf32>
    %167 = arith.mulf %166, %165 : vector<8x128xf32>
    %168 = arith.addf %158, %167 : vector<8x128xf32>
    %169 = vector.broadcast %16 : f32 to vector<8x128xf32>
    %170 = arith.mulf %169, %165 : vector<8x128xf32>
    %171 = arith.addf %161, %170 : vector<8x128xf32>
    %172 = vector.broadcast %25 : f32 to vector<8x128xf32>
    %173 = arith.mulf %172, %165 : vector<8x128xf32>
    %174 = arith.addf %164, %173 : vector<8x128xf32>
    %c127_i32_18 = arith.constant 127 : i32
    %175 = tpu.dynamic_rotate %116 by %c127_i32_18 dim 1 : vector<8x128xf32>, i32 -> vector<8x128xf32>
    %c1_i32_19 = arith.constant 1 : i32
    %176 = tpu.dynamic_rotate %175 by %c1_i32_19 dim 0 : vector<8x128xf32>, i32 -> vector<8x128xf32>
    %177 = vector.broadcast %2 : f32 to vector<8x128xf32>
    %178 = arith.mulf %177, %176 : vector<8x128xf32>
    %179 = arith.addf %168, %178 : vector<8x128xf32>
    %180 = vector.broadcast %11 : f32 to vector<8x128xf32>
    %181 = arith.mulf %180, %176 : vector<8x128xf32>
    %182 = arith.addf %171, %181 : vector<8x128xf32>
    %183 = vector.broadcast %20 : f32 to vector<8x128xf32>
    %184 = arith.mulf %183, %176 : vector<8x128xf32>
    %185 = arith.addf %174, %184 : vector<8x128xf32>
    %186 = vector.broadcast %5 : f32 to vector<8x128xf32>
    %187 = arith.mulf %186, %175 : vector<8x128xf32>
    %188 = arith.addf %179, %187 : vector<8x128xf32>
    %189 = vector.broadcast %14 : f32 to vector<8x128xf32>
    %190 = arith.mulf %189, %175 : vector<8x128xf32>
    %191 = arith.addf %182, %190 : vector<8x128xf32>
    %192 = vector.broadcast %23 : f32 to vector<8x128xf32>
    %193 = arith.mulf %192, %175 : vector<8x128xf32>
    %194 = arith.addf %185, %193 : vector<8x128xf32>
    %c7_i32_20 = arith.constant 7 : i32
    %195 = tpu.dynamic_rotate %175 by %c7_i32_20 dim 0 : vector<8x128xf32>, i32 -> vector<8x128xf32>
    %196 = vector.broadcast %8 : f32 to vector<8x128xf32>
    %197 = arith.mulf %196, %195 : vector<8x128xf32>
    %198 = arith.addf %188, %197 : vector<8x128xf32>
    %199 = vector.broadcast %17 : f32 to vector<8x128xf32>
    %200 = arith.mulf %199, %195 : vector<8x128xf32>
    %201 = arith.addf %191, %200 : vector<8x128xf32>
    %202 = vector.broadcast %26 : f32 to vector<8x128xf32>
    %203 = arith.mulf %202, %195 : vector<8x128xf32>
    %204 = arith.addf %194, %203 : vector<8x128xf32>
    %c0_21 = arith.constant 0 : index
    %c2_22 = arith.constant 2 : index
    %c0_23 = arith.constant 0 : index
    %c0_24 = arith.constant 0 : index
    %205 = vector.load %arg2[%c0_21, %c2_22, %c0_23, %c0_24] : memref<1x8x8x128xf32, #tpu.memory_space<vmem>>, vector<1x1x8x128xf32>
    %206 = vector.shape_cast %205 : vector<1x1x8x128xf32> to vector<8x128xf32>
    %c1_i32_25 = arith.constant 1 : i32
    %207 = tpu.dynamic_rotate %206 by %c1_i32_25 dim 1 : vector<8x128xf32>, i32 -> vector<8x128xf32>
    %c1_i32_26 = arith.constant 1 : i32
    %208 = tpu.dynamic_rotate %207 by %c1_i32_26 dim 0 : vector<8x128xf32>, i32 -> vector<8x128xf32>
    %209 = vector.broadcast %0 : f32 to vector<8x128xf32>
    %210 = arith.mulf %209, %208 : vector<8x128xf32>
    %211 = vector.broadcast %9 : f32 to vector<8x128xf32>
    %212 = arith.mulf %211, %208 : vector<8x128xf32>
    %213 = arith.addf %198, %212 : vector<8x128xf32>
    %214 = vector.broadcast %18 : f32 to vector<8x128xf32>
    %215 = arith.mulf %214, %208 : vector<8x128xf32>
    %216 = arith.addf %201, %215 : vector<8x128xf32>
    %217 = vector.broadcast %3 : f32 to vector<8x128xf32>
    %218 = arith.mulf %217, %207 : vector<8x128xf32>
    %219 = arith.addf %210, %218 : vector<8x128xf32>
    %220 = vector.broadcast %12 : f32 to vector<8x128xf32>
    %221 = arith.mulf %220, %207 : vector<8x128xf32>
    %222 = arith.addf %213, %221 : vector<8x128xf32>
    %223 = vector.broadcast %21 : f32 to vector<8x128xf32>
    %224 = arith.mulf %223, %207 : vector<8x128xf32>
    %225 = arith.addf %216, %224 : vector<8x128xf32>
    %c7_i32_27 = arith.constant 7 : i32
    %226 = tpu.dynamic_rotate %207 by %c7_i32_27 dim 0 : vector<8x128xf32>, i32 -> vector<8x128xf32>
    %227 = vector.broadcast %6 : f32 to vector<8x128xf32>
    %228 = arith.mulf %227, %226 : vector<8x128xf32>
    %229 = arith.addf %219, %228 : vector<8x128xf32>
    %230 = vector.broadcast %15 : f32 to vector<8x128xf32>
    %231 = arith.mulf %230, %226 : vector<8x128xf32>
    %232 = arith.addf %222, %231 : vector<8x128xf32>
    %233 = vector.broadcast %24 : f32 to vector<8x128xf32>
    %234 = arith.mulf %233, %226 : vector<8x128xf32>
    %235 = arith.addf %225, %234 : vector<8x128xf32>
    %c1_i32_28 = arith.constant 1 : i32
    %236 = tpu.dynamic_rotate %206 by %c1_i32_28 dim 0 : vector<8x128xf32>, i32 -> vector<8x128xf32>
    %237 = vector.broadcast %1 : f32 to vector<8x128xf32>
    %238 = arith.mulf %237, %236 : vector<8x128xf32>
    %239 = arith.addf %229, %238 : vector<8x128xf32>
    %240 = vector.broadcast %10 : f32 to vector<8x128xf32>
    %241 = arith.mulf %240, %236 : vector<8x128xf32>
    %242 = arith.addf %232, %241 : vector<8x128xf32>
    %243 = vector.broadcast %19 : f32 to vector<8x128xf32>
    %244 = arith.mulf %243, %236 : vector<8x128xf32>
    %245 = arith.addf %235, %244 : vector<8x128xf32>
    %246 = vector.broadcast %4 : f32 to vector<8x128xf32>
    %247 = arith.mulf %246, %206 : vector<8x128xf32>
    %248 = arith.addf %239, %247 : vector<8x128xf32>
    %249 = vector.broadcast %13 : f32 to vector<8x128xf32>
    %250 = arith.mulf %249, %206 : vector<8x128xf32>
    %251 = arith.addf %242, %250 : vector<8x128xf32>
    %252 = vector.broadcast %22 : f32 to vector<8x128xf32>
    %253 = arith.mulf %252, %206 : vector<8x128xf32>
    %254 = arith.addf %245, %253 : vector<8x128xf32>
    %c7_i32_29 = arith.constant 7 : i32
    %255 = tpu.dynamic_rotate %206 by %c7_i32_29 dim 0 : vector<8x128xf32>, i32 -> vector<8x128xf32>
    %256 = vector.broadcast %7 : f32 to vector<8x128xf32>
    %257 = arith.mulf %256, %255 : vector<8x128xf32>
    %258 = arith.addf %248, %257 : vector<8x128xf32>
    %259 = vector.broadcast %16 : f32 to vector<8x128xf32>
    %260 = arith.mulf %259, %255 : vector<8x128xf32>
    %261 = arith.addf %251, %260 : vector<8x128xf32>
    %262 = vector.broadcast %25 : f32 to vector<8x128xf32>
    %263 = arith.mulf %262, %255 : vector<8x128xf32>
    %264 = arith.addf %254, %263 : vector<8x128xf32>
    %c127_i32_30 = arith.constant 127 : i32
    %265 = tpu.dynamic_rotate %206 by %c127_i32_30 dim 1 : vector<8x128xf32>, i32 -> vector<8x128xf32>
    %c1_i32_31 = arith.constant 1 : i32
    %266 = tpu.dynamic_rotate %265 by %c1_i32_31 dim 0 : vector<8x128xf32>, i32 -> vector<8x128xf32>
    %267 = vector.broadcast %2 : f32 to vector<8x128xf32>
    %268 = arith.mulf %267, %266 : vector<8x128xf32>
    %269 = arith.addf %258, %268 : vector<8x128xf32>
    %270 = vector.broadcast %11 : f32 to vector<8x128xf32>
    %271 = arith.mulf %270, %266 : vector<8x128xf32>
    %272 = arith.addf %261, %271 : vector<8x128xf32>
    %273 = vector.broadcast %20 : f32 to vector<8x128xf32>
    %274 = arith.mulf %273, %266 : vector<8x128xf32>
    %275 = arith.addf %264, %274 : vector<8x128xf32>
    %276 = vector.broadcast %5 : f32 to vector<8x128xf32>
    %277 = arith.mulf %276, %265 : vector<8x128xf32>
    %278 = arith.addf %269, %277 : vector<8x128xf32>
    %279 = vector.broadcast %14 : f32 to vector<8x128xf32>
    %280 = arith.mulf %279, %265 : vector<8x128xf32>
    %281 = arith.addf %272, %280 : vector<8x128xf32>
    %282 = vector.broadcast %23 : f32 to vector<8x128xf32>
    %283 = arith.mulf %282, %265 : vector<8x128xf32>
    %284 = arith.addf %275, %283 : vector<8x128xf32>
    %c7_i32_32 = arith.constant 7 : i32
    %285 = tpu.dynamic_rotate %265 by %c7_i32_32 dim 0 : vector<8x128xf32>, i32 -> vector<8x128xf32>
    %286 = vector.broadcast %8 : f32 to vector<8x128xf32>
    %287 = arith.mulf %286, %285 : vector<8x128xf32>
    %288 = arith.addf %278, %287 : vector<8x128xf32>
    %289 = vector.broadcast %17 : f32 to vector<8x128xf32>
    %290 = arith.mulf %289, %285 : vector<8x128xf32>
    %291 = arith.addf %281, %290 : vector<8x128xf32>
    %292 = vector.broadcast %26 : f32 to vector<8x128xf32>
    %293 = arith.mulf %292, %285 : vector<8x128xf32>
    %294 = arith.addf %284, %293 : vector<8x128xf32>
    %c0_33 = arith.constant 0 : index
    %c3_34 = arith.constant 3 : index
    %c0_35 = arith.constant 0 : index
    %c0_36 = arith.constant 0 : index
    %295 = vector.load %arg2[%c0_33, %c3_34, %c0_35, %c0_36] : memref<1x8x8x128xf32, #tpu.memory_space<vmem>>, vector<1x1x8x128xf32>
    %296 = vector.shape_cast %295 : vector<1x1x8x128xf32> to vector<8x128xf32>
    %c1_i32_37 = arith.constant 1 : i32
    %297 = tpu.dynamic_rotate %296 by %c1_i32_37 dim 1 : vector<8x128xf32>, i32 -> vector<8x128xf32>
    %c1_i32_38 = arith.constant 1 : i32
    %298 = tpu.dynamic_rotate %297 by %c1_i32_38 dim 0 : vector<8x128xf32>, i32 -> vector<8x128xf32>
    %299 = vector.broadcast %0 : f32 to vector<8x128xf32>
    %300 = arith.mulf %299, %298 : vector<8x128xf32>
    %301 = vector.broadcast %9 : f32 to vector<8x128xf32>
    %302 = arith.mulf %301, %298 : vector<8x128xf32>
    %303 = arith.addf %288, %302 : vector<8x128xf32>
    %304 = vector.broadcast %18 : f32 to vector<8x128xf32>
    %305 = arith.mulf %304, %298 : vector<8x128xf32>
    %306 = arith.addf %291, %305 : vector<8x128xf32>
    %307 = vector.broadcast %3 : f32 to vector<8x128xf32>
    %308 = arith.mulf %307, %297 : vector<8x128xf32>
    %309 = arith.addf %300, %308 : vector<8x128xf32>
    %310 = vector.broadcast %12 : f32 to vector<8x128xf32>
    %311 = arith.mulf %310, %297 : vector<8x128xf32>
    %312 = arith.addf %303, %311 : vector<8x128xf32>
    %313 = vector.broadcast %21 : f32 to vector<8x128xf32>
    %314 = arith.mulf %313, %297 : vector<8x128xf32>
    %315 = arith.addf %306, %314 : vector<8x128xf32>
    %c7_i32_39 = arith.constant 7 : i32
    %316 = tpu.dynamic_rotate %297 by %c7_i32_39 dim 0 : vector<8x128xf32>, i32 -> vector<8x128xf32>
    %317 = vector.broadcast %6 : f32 to vector<8x128xf32>
    %318 = arith.mulf %317, %316 : vector<8x128xf32>
    %319 = arith.addf %309, %318 : vector<8x128xf32>
    %320 = vector.broadcast %15 : f32 to vector<8x128xf32>
    %321 = arith.mulf %320, %316 : vector<8x128xf32>
    %322 = arith.addf %312, %321 : vector<8x128xf32>
    %323 = vector.broadcast %24 : f32 to vector<8x128xf32>
    %324 = arith.mulf %323, %316 : vector<8x128xf32>
    %325 = arith.addf %315, %324 : vector<8x128xf32>
    %c1_i32_40 = arith.constant 1 : i32
    %326 = tpu.dynamic_rotate %296 by %c1_i32_40 dim 0 : vector<8x128xf32>, i32 -> vector<8x128xf32>
    %327 = vector.broadcast %1 : f32 to vector<8x128xf32>
    %328 = arith.mulf %327, %326 : vector<8x128xf32>
    %329 = arith.addf %319, %328 : vector<8x128xf32>
    %330 = vector.broadcast %10 : f32 to vector<8x128xf32>
    %331 = arith.mulf %330, %326 : vector<8x128xf32>
    %332 = arith.addf %322, %331 : vector<8x128xf32>
    %333 = vector.broadcast %19 : f32 to vector<8x128xf32>
    %334 = arith.mulf %333, %326 : vector<8x128xf32>
    %335 = arith.addf %325, %334 : vector<8x128xf32>
    %336 = vector.broadcast %4 : f32 to vector<8x128xf32>
    %337 = arith.mulf %336, %296 : vector<8x128xf32>
    %338 = arith.addf %329, %337 : vector<8x128xf32>
    %339 = vector.broadcast %13 : f32 to vector<8x128xf32>
    %340 = arith.mulf %339, %296 : vector<8x128xf32>
    %341 = arith.addf %332, %340 : vector<8x128xf32>
    %342 = vector.broadcast %22 : f32 to vector<8x128xf32>
    %343 = arith.mulf %342, %296 : vector<8x128xf32>
    %344 = arith.addf %335, %343 : vector<8x128xf32>
    %c7_i32_41 = arith.constant 7 : i32
    %345 = tpu.dynamic_rotate %296 by %c7_i32_41 dim 0 : vector<8x128xf32>, i32 -> vector<8x128xf32>
    %346 = vector.broadcast %7 : f32 to vector<8x128xf32>
    %347 = arith.mulf %346, %345 : vector<8x128xf32>
    %348 = arith.addf %338, %347 : vector<8x128xf32>
    %349 = vector.broadcast %16 : f32 to vector<8x128xf32>
    %350 = arith.mulf %349, %345 : vector<8x128xf32>
    %351 = arith.addf %341, %350 : vector<8x128xf32>
    %352 = vector.broadcast %25 : f32 to vector<8x128xf32>
    %353 = arith.mulf %352, %345 : vector<8x128xf32>
    %354 = arith.addf %344, %353 : vector<8x128xf32>
    %c127_i32_42 = arith.constant 127 : i32
    %355 = tpu.dynamic_rotate %296 by %c127_i32_42 dim 1 : vector<8x128xf32>, i32 -> vector<8x128xf32>
    %c1_i32_43 = arith.constant 1 : i32
    %356 = tpu.dynamic_rotate %355 by %c1_i32_43 dim 0 : vector<8x128xf32>, i32 -> vector<8x128xf32>
    %357 = vector.broadcast %2 : f32 to vector<8x128xf32>
    %358 = arith.mulf %357, %356 : vector<8x128xf32>
    %359 = arith.addf %348, %358 : vector<8x128xf32>
    %360 = vector.broadcast %11 : f32 to vector<8x128xf32>
    %361 = arith.mulf %360, %356 : vector<8x128xf32>
    %362 = arith.addf %351, %361 : vector<8x128xf32>
    %363 = vector.broadcast %20 : f32 to vector<8x128xf32>
    %364 = arith.mulf %363, %356 : vector<8x128xf32>
    %365 = arith.addf %354, %364 : vector<8x128xf32>
    %366 = vector.broadcast %5 : f32 to vector<8x128xf32>
    %367 = arith.mulf %366, %355 : vector<8x128xf32>
    %368 = arith.addf %359, %367 : vector<8x128xf32>
    %369 = vector.broadcast %14 : f32 to vector<8x128xf32>
    %370 = arith.mulf %369, %355 : vector<8x128xf32>
    %371 = arith.addf %362, %370 : vector<8x128xf32>
    %372 = vector.broadcast %23 : f32 to vector<8x128xf32>
    %373 = arith.mulf %372, %355 : vector<8x128xf32>
    %374 = arith.addf %365, %373 : vector<8x128xf32>
    %c7_i32_44 = arith.constant 7 : i32
    %375 = tpu.dynamic_rotate %355 by %c7_i32_44 dim 0 : vector<8x128xf32>, i32 -> vector<8x128xf32>
    %376 = vector.broadcast %8 : f32 to vector<8x128xf32>
    %377 = arith.mulf %376, %375 : vector<8x128xf32>
    %378 = arith.addf %368, %377 : vector<8x128xf32>
    %379 = vector.broadcast %17 : f32 to vector<8x128xf32>
    %380 = arith.mulf %379, %375 : vector<8x128xf32>
    %381 = arith.addf %371, %380 : vector<8x128xf32>
    %382 = vector.broadcast %26 : f32 to vector<8x128xf32>
    %383 = arith.mulf %382, %375 : vector<8x128xf32>
    %384 = arith.addf %374, %383 : vector<8x128xf32>
    %c0_45 = arith.constant 0 : index
    %c4_46 = arith.constant 4 : index
    %c0_47 = arith.constant 0 : index
    %c0_48 = arith.constant 0 : index
    %385 = vector.load %arg2[%c0_45, %c4_46, %c0_47, %c0_48] : memref<1x8x8x128xf32, #tpu.memory_space<vmem>>, vector<1x1x8x128xf32>
    %386 = vector.shape_cast %385 : vector<1x1x8x128xf32> to vector<8x128xf32>
    %c1_i32_49 = arith.constant 1 : i32
    %387 = tpu.dynamic_rotate %386 by %c1_i32_49 dim 1 : vector<8x128xf32>, i32 -> vector<8x128xf32>
    %c1_i32_50 = arith.constant 1 : i32
    %388 = tpu.dynamic_rotate %387 by %c1_i32_50 dim 0 : vector<8x128xf32>, i32 -> vector<8x128xf32>
    %389 = vector.broadcast %0 : f32 to vector<8x128xf32>
    %390 = arith.mulf %389, %388 : vector<8x128xf32>
    %391 = vector.broadcast %9 : f32 to vector<8x128xf32>
    %392 = arith.mulf %391, %388 : vector<8x128xf32>
    %393 = arith.addf %378, %392 : vector<8x128xf32>
    %394 = vector.broadcast %18 : f32 to vector<8x128xf32>
    %395 = arith.mulf %394, %388 : vector<8x128xf32>
    %396 = arith.addf %381, %395 : vector<8x128xf32>
    %397 = vector.broadcast %3 : f32 to vector<8x128xf32>
    %398 = arith.mulf %397, %387 : vector<8x128xf32>
    %399 = arith.addf %390, %398 : vector<8x128xf32>
    %400 = vector.broadcast %12 : f32 to vector<8x128xf32>
    %401 = arith.mulf %400, %387 : vector<8x128xf32>
    %402 = arith.addf %393, %401 : vector<8x128xf32>
    %403 = vector.broadcast %21 : f32 to vector<8x128xf32>
    %404 = arith.mulf %403, %387 : vector<8x128xf32>
    %405 = arith.addf %396, %404 : vector<8x128xf32>
    %c7_i32_51 = arith.constant 7 : i32
    %406 = tpu.dynamic_rotate %387 by %c7_i32_51 dim 0 : vector<8x128xf32>, i32 -> vector<8x128xf32>
    %407 = vector.broadcast %6 : f32 to vector<8x128xf32>
    %408 = arith.mulf %407, %406 : vector<8x128xf32>
    %409 = arith.addf %399, %408 : vector<8x128xf32>
    %410 = vector.broadcast %15 : f32 to vector<8x128xf32>
    %411 = arith.mulf %410, %406 : vector<8x128xf32>
    %412 = arith.addf %402, %411 : vector<8x128xf32>
    %413 = vector.broadcast %24 : f32 to vector<8x128xf32>
    %414 = arith.mulf %413, %406 : vector<8x128xf32>
    %415 = arith.addf %405, %414 : vector<8x128xf32>
    %c1_i32_52 = arith.constant 1 : i32
    %416 = tpu.dynamic_rotate %386 by %c1_i32_52 dim 0 : vector<8x128xf32>, i32 -> vector<8x128xf32>
    %417 = vector.broadcast %1 : f32 to vector<8x128xf32>
    %418 = arith.mulf %417, %416 : vector<8x128xf32>
    %419 = arith.addf %409, %418 : vector<8x128xf32>
    %420 = vector.broadcast %10 : f32 to vector<8x128xf32>
    %421 = arith.mulf %420, %416 : vector<8x128xf32>
    %422 = arith.addf %412, %421 : vector<8x128xf32>
    %423 = vector.broadcast %19 : f32 to vector<8x128xf32>
    %424 = arith.mulf %423, %416 : vector<8x128xf32>
    %425 = arith.addf %415, %424 : vector<8x128xf32>
    %426 = vector.broadcast %4 : f32 to vector<8x128xf32>
    %427 = arith.mulf %426, %386 : vector<8x128xf32>
    %428 = arith.addf %419, %427 : vector<8x128xf32>
    %429 = vector.broadcast %13 : f32 to vector<8x128xf32>
    %430 = arith.mulf %429, %386 : vector<8x128xf32>
    %431 = arith.addf %422, %430 : vector<8x128xf32>
    %432 = vector.broadcast %22 : f32 to vector<8x128xf32>
    %433 = arith.mulf %432, %386 : vector<8x128xf32>
    %434 = arith.addf %425, %433 : vector<8x128xf32>
    %c7_i32_53 = arith.constant 7 : i32
    %435 = tpu.dynamic_rotate %386 by %c7_i32_53 dim 0 : vector<8x128xf32>, i32 -> vector<8x128xf32>
    %436 = vector.broadcast %7 : f32 to vector<8x128xf32>
    %437 = arith.mulf %436, %435 : vector<8x128xf32>
    %438 = arith.addf %428, %437 : vector<8x128xf32>
    %439 = vector.broadcast %16 : f32 to vector<8x128xf32>
    %440 = arith.mulf %439, %435 : vector<8x128xf32>
    %441 = arith.addf %431, %440 : vector<8x128xf32>
    %442 = vector.broadcast %25 : f32 to vector<8x128xf32>
    %443 = arith.mulf %442, %435 : vector<8x128xf32>
    %444 = arith.addf %434, %443 : vector<8x128xf32>
    %c127_i32_54 = arith.constant 127 : i32
    %445 = tpu.dynamic_rotate %386 by %c127_i32_54 dim 1 : vector<8x128xf32>, i32 -> vector<8x128xf32>
    %c1_i32_55 = arith.constant 1 : i32
    %446 = tpu.dynamic_rotate %445 by %c1_i32_55 dim 0 : vector<8x128xf32>, i32 -> vector<8x128xf32>
    %447 = vector.broadcast %2 : f32 to vector<8x128xf32>
    %448 = arith.mulf %447, %446 : vector<8x128xf32>
    %449 = arith.addf %438, %448 : vector<8x128xf32>
    %450 = vector.broadcast %11 : f32 to vector<8x128xf32>
    %451 = arith.mulf %450, %446 : vector<8x128xf32>
    %452 = arith.addf %441, %451 : vector<8x128xf32>
    %453 = vector.broadcast %20 : f32 to vector<8x128xf32>
    %454 = arith.mulf %453, %446 : vector<8x128xf32>
    %455 = arith.addf %444, %454 : vector<8x128xf32>
    %456 = vector.broadcast %5 : f32 to vector<8x128xf32>
    %457 = arith.mulf %456, %445 : vector<8x128xf32>
    %458 = arith.addf %449, %457 : vector<8x128xf32>
    %459 = vector.broadcast %14 : f32 to vector<8x128xf32>
    %460 = arith.mulf %459, %445 : vector<8x128xf32>
    %461 = arith.addf %452, %460 : vector<8x128xf32>
    %462 = vector.broadcast %23 : f32 to vector<8x128xf32>
    %463 = arith.mulf %462, %445 : vector<8x128xf32>
    %464 = arith.addf %455, %463 : vector<8x128xf32>
    %c7_i32_56 = arith.constant 7 : i32
    %465 = tpu.dynamic_rotate %445 by %c7_i32_56 dim 0 : vector<8x128xf32>, i32 -> vector<8x128xf32>
    %466 = vector.broadcast %8 : f32 to vector<8x128xf32>
    %467 = arith.mulf %466, %465 : vector<8x128xf32>
    %468 = arith.addf %458, %467 : vector<8x128xf32>
    %469 = vector.broadcast %17 : f32 to vector<8x128xf32>
    %470 = arith.mulf %469, %465 : vector<8x128xf32>
    %471 = arith.addf %461, %470 : vector<8x128xf32>
    %472 = vector.broadcast %26 : f32 to vector<8x128xf32>
    %473 = arith.mulf %472, %465 : vector<8x128xf32>
    %474 = arith.addf %464, %473 : vector<8x128xf32>
    %c0_57 = arith.constant 0 : index
    %c5_58 = arith.constant 5 : index
    %c0_59 = arith.constant 0 : index
    %c0_60 = arith.constant 0 : index
    %475 = vector.load %arg2[%c0_57, %c5_58, %c0_59, %c0_60] : memref<1x8x8x128xf32, #tpu.memory_space<vmem>>, vector<1x1x8x128xf32>
    %476 = vector.shape_cast %475 : vector<1x1x8x128xf32> to vector<8x128xf32>
    %c1_i32_61 = arith.constant 1 : i32
    %477 = tpu.dynamic_rotate %476 by %c1_i32_61 dim 1 : vector<8x128xf32>, i32 -> vector<8x128xf32>
    %c1_i32_62 = arith.constant 1 : i32
    %478 = tpu.dynamic_rotate %477 by %c1_i32_62 dim 0 : vector<8x128xf32>, i32 -> vector<8x128xf32>
    %479 = vector.broadcast %0 : f32 to vector<8x128xf32>
    %480 = arith.mulf %479, %478 : vector<8x128xf32>
    %481 = vector.broadcast %9 : f32 to vector<8x128xf32>
    %482 = arith.mulf %481, %478 : vector<8x128xf32>
    %483 = arith.addf %468, %482 : vector<8x128xf32>
    %484 = vector.broadcast %18 : f32 to vector<8x128xf32>
    %485 = arith.mulf %484, %478 : vector<8x128xf32>
    %486 = arith.addf %471, %485 : vector<8x128xf32>
    %487 = vector.broadcast %3 : f32 to vector<8x128xf32>
    %488 = arith.mulf %487, %477 : vector<8x128xf32>
    %489 = arith.addf %480, %488 : vector<8x128xf32>
    %490 = vector.broadcast %12 : f32 to vector<8x128xf32>
    %491 = arith.mulf %490, %477 : vector<8x128xf32>
    %492 = arith.addf %483, %491 : vector<8x128xf32>
    %493 = vector.broadcast %21 : f32 to vector<8x128xf32>
    %494 = arith.mulf %493, %477 : vector<8x128xf32>
    %495 = arith.addf %486, %494 : vector<8x128xf32>
    %c7_i32_63 = arith.constant 7 : i32
    %496 = tpu.dynamic_rotate %477 by %c7_i32_63 dim 0 : vector<8x128xf32>, i32 -> vector<8x128xf32>
    %497 = vector.broadcast %6 : f32 to vector<8x128xf32>
    %498 = arith.mulf %497, %496 : vector<8x128xf32>
    %499 = arith.addf %489, %498 : vector<8x128xf32>
    %500 = vector.broadcast %15 : f32 to vector<8x128xf32>
    %501 = arith.mulf %500, %496 : vector<8x128xf32>
    %502 = arith.addf %492, %501 : vector<8x128xf32>
    %503 = vector.broadcast %24 : f32 to vector<8x128xf32>
    %504 = arith.mulf %503, %496 : vector<8x128xf32>
    %505 = arith.addf %495, %504 : vector<8x128xf32>
    %c1_i32_64 = arith.constant 1 : i32
    %506 = tpu.dynamic_rotate %476 by %c1_i32_64 dim 0 : vector<8x128xf32>, i32 -> vector<8x128xf32>
    %507 = vector.broadcast %1 : f32 to vector<8x128xf32>
    %508 = arith.mulf %507, %506 : vector<8x128xf32>
    %509 = arith.addf %499, %508 : vector<8x128xf32>
    %510 = vector.broadcast %10 : f32 to vector<8x128xf32>
    %511 = arith.mulf %510, %506 : vector<8x128xf32>
    %512 = arith.addf %502, %511 : vector<8x128xf32>
    %513 = vector.broadcast %19 : f32 to vector<8x128xf32>
    %514 = arith.mulf %513, %506 : vector<8x128xf32>
    %515 = arith.addf %505, %514 : vector<8x128xf32>
    %516 = vector.broadcast %4 : f32 to vector<8x128xf32>
    %517 = arith.mulf %516, %476 : vector<8x128xf32>
    %518 = arith.addf %509, %517 : vector<8x128xf32>
    %519 = vector.broadcast %13 : f32 to vector<8x128xf32>
    %520 = arith.mulf %519, %476 : vector<8x128xf32>
    %521 = arith.addf %512, %520 : vector<8x128xf32>
    %522 = vector.broadcast %22 : f32 to vector<8x128xf32>
    %523 = arith.mulf %522, %476 : vector<8x128xf32>
    %524 = arith.addf %515, %523 : vector<8x128xf32>
    %c7_i32_65 = arith.constant 7 : i32
    %525 = tpu.dynamic_rotate %476 by %c7_i32_65 dim 0 : vector<8x128xf32>, i32 -> vector<8x128xf32>
    %526 = vector.broadcast %7 : f32 to vector<8x128xf32>
    %527 = arith.mulf %526, %525 : vector<8x128xf32>
    %528 = arith.addf %518, %527 : vector<8x128xf32>
    %529 = vector.broadcast %16 : f32 to vector<8x128xf32>
    %530 = arith.mulf %529, %525 : vector<8x128xf32>
    %531 = arith.addf %521, %530 : vector<8x128xf32>
    %532 = vector.broadcast %25 : f32 to vector<8x128xf32>
    %533 = arith.mulf %532, %525 : vector<8x128xf32>
    %534 = arith.addf %524, %533 : vector<8x128xf32>
    %c127_i32_66 = arith.constant 127 : i32
    %535 = tpu.dynamic_rotate %476 by %c127_i32_66 dim 1 : vector<8x128xf32>, i32 -> vector<8x128xf32>
    %c1_i32_67 = arith.constant 1 : i32
    %536 = tpu.dynamic_rotate %535 by %c1_i32_67 dim 0 : vector<8x128xf32>, i32 -> vector<8x128xf32>
    %537 = vector.broadcast %2 : f32 to vector<8x128xf32>
    %538 = arith.mulf %537, %536 : vector<8x128xf32>
    %539 = arith.addf %528, %538 : vector<8x128xf32>
    %540 = vector.broadcast %11 : f32 to vector<8x128xf32>
    %541 = arith.mulf %540, %536 : vector<8x128xf32>
    %542 = arith.addf %531, %541 : vector<8x128xf32>
    %543 = vector.broadcast %20 : f32 to vector<8x128xf32>
    %544 = arith.mulf %543, %536 : vector<8x128xf32>
    %545 = arith.addf %534, %544 : vector<8x128xf32>
    %546 = vector.broadcast %5 : f32 to vector<8x128xf32>
    %547 = arith.mulf %546, %535 : vector<8x128xf32>
    %548 = arith.addf %539, %547 : vector<8x128xf32>
    %549 = vector.broadcast %14 : f32 to vector<8x128xf32>
    %550 = arith.mulf %549, %535 : vector<8x128xf32>
    %551 = arith.addf %542, %550 : vector<8x128xf32>
    %552 = vector.broadcast %23 : f32 to vector<8x128xf32>
    %553 = arith.mulf %552, %535 : vector<8x128xf32>
    %554 = arith.addf %545, %553 : vector<8x128xf32>
    %c7_i32_68 = arith.constant 7 : i32
    %555 = tpu.dynamic_rotate %535 by %c7_i32_68 dim 0 : vector<8x128xf32>, i32 -> vector<8x128xf32>
    %556 = vector.broadcast %8 : f32 to vector<8x128xf32>
    %557 = arith.mulf %556, %555 : vector<8x128xf32>
    %558 = arith.addf %548, %557 : vector<8x128xf32>
    %559 = vector.broadcast %17 : f32 to vector<8x128xf32>
    %560 = arith.mulf %559, %555 : vector<8x128xf32>
    %561 = arith.addf %551, %560 : vector<8x128xf32>
    %562 = vector.broadcast %26 : f32 to vector<8x128xf32>
    %563 = arith.mulf %562, %555 : vector<8x128xf32>
    %564 = arith.addf %554, %563 : vector<8x128xf32>
    %c0_69 = arith.constant 0 : index
    %c6_70 = arith.constant 6 : index
    %c0_71 = arith.constant 0 : index
    %c0_72 = arith.constant 0 : index
    %565 = vector.load %arg2[%c0_69, %c6_70, %c0_71, %c0_72] : memref<1x8x8x128xf32, #tpu.memory_space<vmem>>, vector<1x1x8x128xf32>
    %566 = vector.shape_cast %565 : vector<1x1x8x128xf32> to vector<8x128xf32>
    %c1_i32_73 = arith.constant 1 : i32
    %567 = tpu.dynamic_rotate %566 by %c1_i32_73 dim 1 : vector<8x128xf32>, i32 -> vector<8x128xf32>
    %c1_i32_74 = arith.constant 1 : i32
    %568 = tpu.dynamic_rotate %567 by %c1_i32_74 dim 0 : vector<8x128xf32>, i32 -> vector<8x128xf32>
    %569 = vector.broadcast %0 : f32 to vector<8x128xf32>
    %570 = arith.mulf %569, %568 : vector<8x128xf32>
    %571 = arith.addf %114, %570 : vector<8x128xf32>
    %572 = vector.broadcast %9 : f32 to vector<8x128xf32>
    %573 = arith.mulf %572, %568 : vector<8x128xf32>
    %574 = arith.addf %558, %573 : vector<8x128xf32>
    %575 = vector.broadcast %18 : f32 to vector<8x128xf32>
    %576 = arith.mulf %575, %568 : vector<8x128xf32>
    %577 = arith.addf %561, %576 : vector<8x128xf32>
    %578 = vector.broadcast %3 : f32 to vector<8x128xf32>
    %579 = arith.mulf %578, %567 : vector<8x128xf32>
    %580 = arith.addf %571, %579 : vector<8x128xf32>
    %581 = vector.broadcast %12 : f32 to vector<8x128xf32>
    %582 = arith.mulf %581, %567 : vector<8x128xf32>
    %583 = arith.addf %574, %582 : vector<8x128xf32>
    %584 = vector.broadcast %21 : f32 to vector<8x128xf32>
    %585 = arith.mulf %584, %567 : vector<8x128xf32>
    %586 = arith.addf %577, %585 : vector<8x128xf32>
    %c7_i32_75 = arith.constant 7 : i32
    %587 = tpu.dynamic_rotate %567 by %c7_i32_75 dim 0 : vector<8x128xf32>, i32 -> vector<8x128xf32>
    %588 = vector.broadcast %6 : f32 to vector<8x128xf32>
    %589 = arith.mulf %588, %587 : vector<8x128xf32>
    %590 = arith.addf %580, %589 : vector<8x128xf32>
    %591 = vector.broadcast %15 : f32 to vector<8x128xf32>
    %592 = arith.mulf %591, %587 : vector<8x128xf32>
    %593 = arith.addf %583, %592 : vector<8x128xf32>
    %594 = vector.broadcast %24 : f32 to vector<8x128xf32>
    %595 = arith.mulf %594, %587 : vector<8x128xf32>
    %596 = arith.addf %586, %595 : vector<8x128xf32>
    %c1_i32_76 = arith.constant 1 : i32
    %597 = tpu.dynamic_rotate %566 by %c1_i32_76 dim 0 : vector<8x128xf32>, i32 -> vector<8x128xf32>
    %598 = vector.broadcast %1 : f32 to vector<8x128xf32>
    %599 = arith.mulf %598, %597 : vector<8x128xf32>
    %600 = arith.addf %590, %599 : vector<8x128xf32>
    %601 = vector.broadcast %10 : f32 to vector<8x128xf32>
    %602 = arith.mulf %601, %597 : vector<8x128xf32>
    %603 = arith.addf %593, %602 : vector<8x128xf32>
    %604 = vector.broadcast %19 : f32 to vector<8x128xf32>
    %605 = arith.mulf %604, %597 : vector<8x128xf32>
    %606 = arith.addf %596, %605 : vector<8x128xf32>
    %607 = vector.broadcast %4 : f32 to vector<8x128xf32>
    %608 = arith.mulf %607, %566 : vector<8x128xf32>
    %609 = arith.addf %600, %608 : vector<8x128xf32>
    %610 = vector.broadcast %13 : f32 to vector<8x128xf32>
    %611 = arith.mulf %610, %566 : vector<8x128xf32>
    %612 = arith.addf %603, %611 : vector<8x128xf32>
    %613 = vector.broadcast %22 : f32 to vector<8x128xf32>
    %614 = arith.mulf %613, %566 : vector<8x128xf32>
    %615 = arith.addf %606, %614 : vector<8x128xf32>
    %c7_i32_77 = arith.constant 7 : i32
    %616 = tpu.dynamic_rotate %566 by %c7_i32_77 dim 0 : vector<8x128xf32>, i32 -> vector<8x128xf32>
    %617 = vector.broadcast %7 : f32 to vector<8x128xf32>
    %618 = arith.mulf %617, %616 : vector<8x128xf32>
    %619 = arith.addf %609, %618 : vector<8x128xf32>
    %620 = vector.broadcast %16 : f32 to vector<8x128xf32>
    %621 = arith.mulf %620, %616 : vector<8x128xf32>
    %622 = arith.addf %612, %621 : vector<8x128xf32>
    %623 = vector.broadcast %25 : f32 to vector<8x128xf32>
    %624 = arith.mulf %623, %616 : vector<8x128xf32>
    %625 = arith.addf %615, %624 : vector<8x128xf32>
    %c127_i32_78 = arith.constant 127 : i32
    %626 = tpu.dynamic_rotate %566 by %c127_i32_78 dim 1 : vector<8x128xf32>, i32 -> vector<8x128xf32>
    %c1_i32_79 = arith.constant 1 : i32
    %627 = tpu.dynamic_rotate %626 by %c1_i32_79 dim 0 : vector<8x128xf32>, i32 -> vector<8x128xf32>
    %628 = vector.broadcast %2 : f32 to vector<8x128xf32>
    %629 = arith.mulf %628, %627 : vector<8x128xf32>
    %630 = arith.addf %619, %629 : vector<8x128xf32>
    %631 = vector.broadcast %11 : f32 to vector<8x128xf32>
    %632 = arith.mulf %631, %627 : vector<8x128xf32>
    %633 = arith.addf %622, %632 : vector<8x128xf32>
    %634 = vector.broadcast %20 : f32 to vector<8x128xf32>
    %635 = arith.mulf %634, %627 : vector<8x128xf32>
    %636 = arith.addf %625, %635 : vector<8x128xf32>
    %637 = vector.broadcast %5 : f32 to vector<8x128xf32>
    %638 = arith.mulf %637, %626 : vector<8x128xf32>
    %639 = arith.addf %630, %638 : vector<8x128xf32>
    %640 = vector.broadcast %14 : f32 to vector<8x128xf32>
    %641 = arith.mulf %640, %626 : vector<8x128xf32>
    %642 = arith.addf %633, %641 : vector<8x128xf32>
    %643 = vector.broadcast %23 : f32 to vector<8x128xf32>
    %644 = arith.mulf %643, %626 : vector<8x128xf32>
    %645 = arith.addf %636, %644 : vector<8x128xf32>
    %c7_i32_80 = arith.constant 7 : i32
    %646 = tpu.dynamic_rotate %626 by %c7_i32_80 dim 0 : vector<8x128xf32>, i32 -> vector<8x128xf32>
    %647 = vector.broadcast %8 : f32 to vector<8x128xf32>
    %648 = arith.mulf %647, %646 : vector<8x128xf32>
    %649 = arith.addf %639, %648 : vector<8x128xf32>
    %650 = vector.broadcast %17 : f32 to vector<8x128xf32>
    %651 = arith.mulf %650, %646 : vector<8x128xf32>
    %652 = arith.addf %642, %651 : vector<8x128xf32>
    %653 = vector.broadcast %26 : f32 to vector<8x128xf32>
    %654 = arith.mulf %653, %646 : vector<8x128xf32>
    %655 = arith.addf %645, %654 : vector<8x128xf32>
    %c0_81 = arith.constant 0 : index
    %c7_82 = arith.constant 7 : index
    %c0_83 = arith.constant 0 : index
    %c0_84 = arith.constant 0 : index
    %656 = vector.load %arg2[%c0_81, %c7_82, %c0_83, %c0_84] : memref<1x8x8x128xf32, #tpu.memory_space<vmem>>, vector<1x1x8x128xf32>
    %657 = vector.shape_cast %656 : vector<1x1x8x128xf32> to vector<8x128xf32>
    %c1_i32_85 = arith.constant 1 : i32
    %658 = tpu.dynamic_rotate %657 by %c1_i32_85 dim 1 : vector<8x128xf32>, i32 -> vector<8x128xf32>
    %c1_i32_86 = arith.constant 1 : i32
    %659 = tpu.dynamic_rotate %658 by %c1_i32_86 dim 0 : vector<8x128xf32>, i32 -> vector<8x128xf32>
    %660 = vector.broadcast %0 : f32 to vector<8x128xf32>
    %661 = arith.mulf %660, %659 : vector<8x128xf32>
    %662 = arith.addf %204, %661 : vector<8x128xf32>
    %663 = vector.broadcast %9 : f32 to vector<8x128xf32>
    %664 = arith.mulf %663, %659 : vector<8x128xf32>
    %665 = arith.addf %649, %664 : vector<8x128xf32>
    %666 = vector.broadcast %18 : f32 to vector<8x128xf32>
    %667 = arith.mulf %666, %659 : vector<8x128xf32>
    %668 = arith.addf %652, %667 : vector<8x128xf32>
    %669 = vector.broadcast %3 : f32 to vector<8x128xf32>
    %670 = arith.mulf %669, %658 : vector<8x128xf32>
    %671 = arith.addf %662, %670 : vector<8x128xf32>
    %672 = vector.broadcast %12 : f32 to vector<8x128xf32>
    %673 = arith.mulf %672, %658 : vector<8x128xf32>
    %674 = arith.addf %665, %673 : vector<8x128xf32>
    %675 = vector.broadcast %21 : f32 to vector<8x128xf32>
    %676 = arith.mulf %675, %658 : vector<8x128xf32>
    %677 = arith.addf %668, %676 : vector<8x128xf32>
    %c7_i32_87 = arith.constant 7 : i32
    %678 = tpu.dynamic_rotate %658 by %c7_i32_87 dim 0 : vector<8x128xf32>, i32 -> vector<8x128xf32>
    %679 = vector.broadcast %6 : f32 to vector<8x128xf32>
    %680 = arith.mulf %679, %678 : vector<8x128xf32>
    %681 = arith.addf %671, %680 : vector<8x128xf32>
    %682 = vector.broadcast %15 : f32 to vector<8x128xf32>
    %683 = arith.mulf %682, %678 : vector<8x128xf32>
    %684 = arith.addf %674, %683 : vector<8x128xf32>
    %685 = vector.broadcast %24 : f32 to vector<8x128xf32>
    %686 = arith.mulf %685, %678 : vector<8x128xf32>
    %687 = arith.addf %677, %686 : vector<8x128xf32>
    %c1_i32_88 = arith.constant 1 : i32
    %688 = tpu.dynamic_rotate %657 by %c1_i32_88 dim 0 : vector<8x128xf32>, i32 -> vector<8x128xf32>
    %689 = vector.broadcast %1 : f32 to vector<8x128xf32>
    %690 = arith.mulf %689, %688 : vector<8x128xf32>
    %691 = arith.addf %681, %690 : vector<8x128xf32>
    %692 = vector.broadcast %10 : f32 to vector<8x128xf32>
    %693 = arith.mulf %692, %688 : vector<8x128xf32>
    %694 = arith.addf %684, %693 : vector<8x128xf32>
    %695 = vector.broadcast %19 : f32 to vector<8x128xf32>
    %696 = arith.mulf %695, %688 : vector<8x128xf32>
    %697 = arith.addf %687, %696 : vector<8x128xf32>
    %698 = vector.broadcast %4 : f32 to vector<8x128xf32>
    %699 = arith.mulf %698, %657 : vector<8x128xf32>
    %700 = arith.addf %691, %699 : vector<8x128xf32>
    %701 = vector.broadcast %13 : f32 to vector<8x128xf32>
    %702 = arith.mulf %701, %657 : vector<8x128xf32>
    %703 = arith.addf %694, %702 : vector<8x128xf32>
    %704 = vector.broadcast %22 : f32 to vector<8x128xf32>
    %705 = arith.mulf %704, %657 : vector<8x128xf32>
    %706 = arith.addf %697, %705 : vector<8x128xf32>
    %c7_i32_89 = arith.constant 7 : i32
    %707 = tpu.dynamic_rotate %657 by %c7_i32_89 dim 0 : vector<8x128xf32>, i32 -> vector<8x128xf32>
    %708 = vector.broadcast %7 : f32 to vector<8x128xf32>
    %709 = arith.mulf %708, %707 : vector<8x128xf32>
    %710 = arith.addf %700, %709 : vector<8x128xf32>
    %711 = vector.broadcast %16 : f32 to vector<8x128xf32>
    %712 = arith.mulf %711, %707 : vector<8x128xf32>
    %713 = arith.addf %703, %712 : vector<8x128xf32>
    %714 = vector.broadcast %25 : f32 to vector<8x128xf32>
    %715 = arith.mulf %714, %707 : vector<8x128xf32>
    %716 = arith.addf %706, %715 : vector<8x128xf32>
    %c127_i32_90 = arith.constant 127 : i32
    %717 = tpu.dynamic_rotate %657 by %c127_i32_90 dim 1 : vector<8x128xf32>, i32 -> vector<8x128xf32>
    %c1_i32_91 = arith.constant 1 : i32
    %718 = tpu.dynamic_rotate %717 by %c1_i32_91 dim 0 : vector<8x128xf32>, i32 -> vector<8x128xf32>
    %719 = vector.broadcast %2 : f32 to vector<8x128xf32>
    %720 = arith.mulf %719, %718 : vector<8x128xf32>
    %721 = arith.addf %710, %720 : vector<8x128xf32>
    %722 = vector.broadcast %11 : f32 to vector<8x128xf32>
    %723 = arith.mulf %722, %718 : vector<8x128xf32>
    %724 = arith.addf %713, %723 : vector<8x128xf32>
    %725 = vector.broadcast %20 : f32 to vector<8x128xf32>
    %726 = arith.mulf %725, %718 : vector<8x128xf32>
    %727 = arith.addf %716, %726 : vector<8x128xf32>
    %728 = vector.broadcast %5 : f32 to vector<8x128xf32>
    %729 = arith.mulf %728, %717 : vector<8x128xf32>
    %730 = arith.addf %721, %729 : vector<8x128xf32>
    %731 = vector.broadcast %14 : f32 to vector<8x128xf32>
    %732 = arith.mulf %731, %717 : vector<8x128xf32>
    %733 = arith.addf %724, %732 : vector<8x128xf32>
    %734 = vector.broadcast %23 : f32 to vector<8x128xf32>
    %735 = arith.mulf %734, %717 : vector<8x128xf32>
    %736 = arith.addf %727, %735 : vector<8x128xf32>
    %c7_i32_92 = arith.constant 7 : i32
    %737 = tpu.dynamic_rotate %717 by %c7_i32_92 dim 0 : vector<8x128xf32>, i32 -> vector<8x128xf32>
    %738 = vector.broadcast %8 : f32 to vector<8x128xf32>
    %739 = arith.mulf %738, %737 : vector<8x128xf32>
    %740 = arith.addf %730, %739 : vector<8x128xf32>
    %741 = vector.broadcast %17 : f32 to vector<8x128xf32>
    %742 = arith.mulf %741, %737 : vector<8x128xf32>
    %743 = arith.addf %733, %742 : vector<8x128xf32>
    %744 = vector.broadcast %26 : f32 to vector<8x128xf32>
    %745 = arith.mulf %744, %737 : vector<8x128xf32>
    %746 = arith.addf %736, %745 : vector<8x128xf32>
    %c0_93 = arith.constant 0 : index
    %c0_94 = arith.constant 0 : index
    %c0_95 = arith.constant 0 : index
    %c0_96 = arith.constant 0 : index
    %747 = vector.load %arg3[%c0_93, %c0_94, %c0_95, %c0_96] : memref<1x8x8x128xf32, #tpu.memory_space<vmem>>, vector<1x1x8x128xf32>
    %748 = vector.shape_cast %747 : vector<1x1x8x128xf32> to vector<8x128xf32>
    %749 = vector.shape_cast %740 : vector<8x128xf32> to vector<1x1x8x128xf32>
    tpu.vector_store %arg3[%c0_93, %c0_94, %c0_95, %c0_96], %749 {strides = array<i32>} : memref<1x8x8x128xf32, #tpu.memory_space<vmem>>, vector<1x1x8x128xf32>,
    %c0_97 = arith.constant 0 : index
    %c1_98 = arith.constant 1 : index
    %c0_99 = arith.constant 0 : index
    %c0_100 = arith.constant 0 : index
    %750 = vector.load %arg3[%c0_97, %c1_98, %c0_99, %c0_100] : memref<1x8x8x128xf32, #tpu.memory_space<vmem>>, vector<1x1x8x128xf32>
    %751 = vector.shape_cast %750 : vector<1x1x8x128xf32> to vector<8x128xf32>
    %752 = vector.shape_cast %294 : vector<8x128xf32> to vector<1x1x8x128xf32>
    tpu.vector_store %arg3[%c0_97, %c1_98, %c0_99, %c0_100], %752 {strides = array<i32>} : memref<1x8x8x128xf32, #tpu.memory_space<vmem>>, vector<1x1x8x128xf32>,
    %c0_101 = arith.constant 0 : index
    %c2_102 = arith.constant 2 : index
    %c0_103 = arith.constant 0 : index
    %c0_104 = arith.constant 0 : index
    %753 = vector.load %arg3[%c0_101, %c2_102, %c0_103, %c0_104] : memref<1x8x8x128xf32, #tpu.memory_space<vmem>>, vector<1x1x8x128xf32>
    %754 = vector.shape_cast %753 : vector<1x1x8x128xf32> to vector<8x128xf32>
    %755 = vector.shape_cast %384 : vector<8x128xf32> to vector<1x1x8x128xf32>
    tpu.vector_store %arg3[%c0_101, %c2_102, %c0_103, %c0_104], %755 {strides = array<i32>} : memref<1x8x8x128xf32, #tpu.memory_space<vmem>>, vector<1x1x8x128xf32>,
    %c0_105 = arith.constant 0 : index
    %c3_106 = arith.constant 3 : index
    %c0_107 = arith.constant 0 : index
    %c0_108 = arith.constant 0 : index
    %756 = vector.load %arg3[%c0_105, %c3_106, %c0_107, %c0_108] : memref<1x8x8x128xf32, #tpu.memory_space<vmem>>, vector<1x1x8x128xf32>
    %757 = vector.shape_cast %756 : vector<1x1x8x128xf32> to vector<8x128xf32>
    %758 = vector.shape_cast %474 : vector<8x128xf32> to vector<1x1x8x128xf32>
    tpu.vector_store %arg3[%c0_105, %c3_106, %c0_107, %c0_108], %758 {strides = array<i32>} : memref<1x8x8x128xf32, #tpu.memory_space<vmem>>, vector<1x1x8x128xf32>,
    %c0_109 = arith.constant 0 : index
    %c4_110 = arith.constant 4 : index
    %c0_111 = arith.constant 0 : index
    %c0_112 = arith.constant 0 : index
    %759 = vector.load %arg3[%c0_109, %c4_110, %c0_111, %c0_112] : memref<1x8x8x128xf32, #tpu.memory_space<vmem>>, vector<1x1x8x128xf32>
    %760 = vector.shape_cast %759 : vector<1x1x8x128xf32> to vector<8x128xf32>
    %761 = vector.shape_cast %564 : vector<8x128xf32> to vector<1x1x8x128xf32>
    tpu.vector_store %arg3[%c0_109, %c4_110, %c0_111, %c0_112], %761 {strides = array<i32>} : memref<1x8x8x128xf32, #tpu.memory_space<vmem>>, vector<1x1x8x128xf32>,
    %c0_113 = arith.constant 0 : index
    %c5_114 = arith.constant 5 : index
    %c0_115 = arith.constant 0 : index
    %c0_116 = arith.constant 0 : index
    %762 = vector.load %arg3[%c0_113, %c5_114, %c0_115, %c0_116] : memref<1x8x8x128xf32, #tpu.memory_space<vmem>>, vector<1x1x8x128xf32>
    %763 = vector.shape_cast %762 : vector<1x1x8x128xf32> to vector<8x128xf32>
    %764 = vector.shape_cast %655 : vector<8x128xf32> to vector<1x1x8x128xf32>
    tpu.vector_store %arg3[%c0_113, %c5_114, %c0_115, %c0_116], %764 {strides = array<i32>} : memref<1x8x8x128xf32, #tpu.memory_space<vmem>>, vector<1x1x8x128xf32>,
    %c0_117 = arith.constant 0 : index
    %c6_118 = arith.constant 6 : index
    %c0_119 = arith.constant 0 : index
    %c0_120 = arith.constant 0 : index
    %765 = vector.load %arg3[%c0_117, %c6_118, %c0_119, %c0_120] : memref<1x8x8x128xf32, #tpu.memory_space<vmem>>, vector<1x1x8x128xf32>
    %766 = vector.shape_cast %765 : vector<1x1x8x128xf32> to vector<8x128xf32>
    %767 = vector.shape_cast %746 : vector<8x128xf32> to vector<1x1x8x128xf32>
    tpu.vector_store %arg3[%c0_117, %c6_118, %c0_119, %c0_120], %767 {strides = array<i32>} : memref<1x8x8x128xf32, #tpu.memory_space<vmem>>, vector<1x1x8x128xf32>,
    %c0_121 = arith.constant 0 : index
    %c7_122 = arith.constant 7 : index
    %c0_123 = arith.constant 0 : index
    %c0_124 = arith.constant 0 : index
    %768 = vector.load %arg3[%c0_121, %c7_122, %c0_123, %c0_124] : memref<1x8x8x128xf32, #tpu.memory_space<vmem>>, vector<1x1x8x128xf32>
    %769 = vector.shape_cast %768 : vector<1x1x8x128xf32> to vector<8x128xf32>
    %770 = vector.shape_cast %743 : vector<8x128xf32> to vector<1x1x8x128xf32>
    tpu.vector_store %arg3[%c0_121, %c7_122, %c0_123, %c0_124], %770 {strides = array<i32>} : memref<1x8x8x128xf32, #tpu.memory_space<vmem>>, vector<1x1x8x128xf32>,
    return
  }
  func.func @transform_0(%arg0: i32) -> i32 {
    %c0_i32 = arith.constant 0 : i32
    %c0_i32_0 = arith.constant 0 : i32
    return %c0_i32 : i32
  }
  func.func @transform_1(%arg0: i32) -> (i32, i32, i32, i32) {
    %c0_i32 = arith.constant 0 : i32
    %c0_i32_0 = arith.constant 0 : i32
    %c0_i32_1 = arith.constant 0 : i32
    %c0_i32_2 = arith.constant 0 : i32
    return %arg0, %c0_i32, %c0_i32_0, %c0_i32_1 : i32, i32, i32, i32
  }
  func.func @transform_2(%arg0: i32) -> (i32, i32, i32, i32) {
    %c0_i32 = arith.constant 0 : i32
    %c0_i32_0 = arith.constant 0 : i32
    %c0_i32_1 = arith.constant 0 : i32
    %c0_i32_2 = arith.constant 0 : i32
    return %arg0, %c0_i32, %c0_i32_0, %c0_i32_1 : i32, i32, i32, i32
  }
}

</mosaic_0001>

<llo_original>
// kernel: circular_conv3d.1
$region0: #{circular_conv3d.1}
  #allocation0 [shape = 'u32[]', space=smem, size = 0x4, offset = 0x4, fixed_abs, tag = 'smem constant byte address 0x4 - core index']
  #allocation1 [shape = 'u32[144,128]{1,0:T(1,128)}', space=vmem, size = 0x12000, scoped, tag = 'internal scratch']
  %s0 = inlined_call_operand.vmem [shape: f32[27], index: 0, kind: input, shape index: {}]
  %s1 = inlined_call_operand.hbm [shape: f32[2,8,8,128], index: 1, kind: input, shape index: {}]
  %s2 = inlined_call_operand.hbm [shape: f32[2,8,8,128], index: 2, kind: output, shape index: {}]
  %s3 = sld [smem:[#allocation0]]
  $region49: #{circular_conv3d.1} parent=0
    _
  %s5 = ssub.s32 1, %s3
  %s6 = scalar_select 0, %s5, %s3
  $region1: #{circular_conv3d.1} parent=0
    #allocation2 [shape = 'u8[512]{0}', space=smem, size = 0x200, scoped, tag = 'input window, operand 0, single buffered']
    #allocation3 [shape = 's32[2]{0}', space=sflag, size = 0x8, scoped, tag = 'scoped memory for circular_conv3d.1']
    #allocation4 [shape = 's32[2]{0}', space=sflag, size = 0x8, scoped, tag = 'scoped memory for circular_conv3d.1']
    #allocation5 [shape = 's32[2]{0}', space=sflag, size = 0x8, scoped, tag = 'scoped memory for circular_conv3d.1']
    #allocation6 [shape = 'u8[65536]{0}', space=vmem, size = 0x10000, scoped, tag = 'input window, operand 1']
    #allocation7 [shape = 'u8[65536]{0}', space=vmem, size = 0x10000, scoped, tag = 'output window, operand 0']
    %7 = vsyncpa [#allocation5], 0
    %8 = vsyncpa [#allocation3], 0
    %s9 = scalar_lea.sflag [#allocation3], 1
    %10 = vsyncpa %s9, 0
    %11 = vsyncpa [#allocation4], 0
    %s12 = scalar_lea.sflag [#allocation4], 1
    %13 = vsyncpa %s12, 0
    loop: start=0, step=1, limit=4
    $region2: #{circular_conv3d.1} parent=1 // loop_pre_header
      _
    $region3: #{circular_conv3d.1} parent=1 // loop_header
      %s15 = sphi 0, %s19
      %p16 = scmp.ge.s32.totalorder %s15, 4
      %s23 = sphi 0, %s23
      %s25 = sphi 0, %s23
      %s26 = sphi 0, %s25
      %s40 = sphi 0, %s26
      %s46 = sphi 0, %s48
      %s49 = sphi 0, %s46
      %s50 = sphi 0, %s49
      %s66 = sphi 0, %s50
      %s72 = sphi 0, %s74
      %s75 = sphi 0, %s72
      %s76 = sphi 0, %s75
      %s92 = sphi 0, %s76
    $region4: #{circular_conv3d.1} parent=1 // loop_header_branch
      %18 = sbr.rel (%p16) target = $region8
    $region5: #{circular_conv3d.1} parent=1 // loop_body
      %s20 = ssub.s32 %s15, 1
      %s21 = ssub.s32 %s15, 2
      %s22 = sadd.s32 %s15, 1
      %s24 = sadd.s32 %s23, 1
      %p27 = scmp.eq.s32.totalorder %s15, 1
      %p28 = scmp.ne.s32.totalorder %s23, %s25
      %p29 = scmp.eq.s32.totalorder %s15, 0
      %p30 = por %p28, %p29
      %p31 = scmp.ne.s32.totalorder %s23, %s25
      %p32 = scmp.eq.s32.totalorder %s20, 1
      %p33 = por %p31, %p32
      %p34 = scmp.ne.s32.totalorder %s25, %s26
      %p35 = scmp.eq.s32.totalorder %s20, 0
      %p36 = por %p34, %p35
      %p37 = scmp.ne.s32.totalorder %s25, %s26
      %p38 = scmp.eq.s32.totalorder %s21, 1
      %p39 = por %p37, %p38
      %p41 = scmp.ne.s32.totalorder %s26, %s40
      %p42 = scmp.eq.s32.totalorder %s21, 0
      %p43 = por %p41, %p42
      %s44 = ssub.s32 %s15, %s22
      %p45 = scmp.eq.s32.totalorder %s44, 0
      %s47 = sadd.s32 %s46, 1
      %s48 = scalar_select %p45, %s46, %s47
      %p51 = pneg %p45
      %p52 = scmp.eq.s32.totalorder %s15, 1
      %p53 = por %p51, %p52
      %p54 = scmp.ne.s32.totalorder %s46, %s49
      %p55 = scmp.eq.s32.totalorder %s15, 0
      %p56 = por %p54, %p55
      %p57 = scmp.ne.s32.totalorder %s46, %s49
      %p58 = scmp.eq.s32.totalorder %s20, 1
      %p59 = por %p57, %p58
      %p60 = scmp.ne.s32.totalorder %s49, %s50
      %p61 = scmp.eq.s32.totalorder %s20, 0
      %p62 = por %p60, %p61
      %p63 = scmp.ne.s32.totalorder %s49, %s50
      %p64 = scmp.eq.s32.totalorder %s21, 1
      %p65 = por %p63, %p64
      %p67 = scmp.ne.s32.totalorder %s50, %s66
      %p68 = scmp.eq.s32.totalorder %s21, 0
      %p69 = por %p67, %p68
      %s70 = ssub.s32 %s15, %s22
      %p71 = scmp.eq.s32.totalorder %s70, 0
      %s73 = sadd.s32 %s72, 1
      %s74 = scalar_select %p71, %s72, %s73
      %p77 = pneg %p71
      %p78 = scmp.eq.s32.totalorder %s15, 1
      %p79 = por %p77, %p78
      %p80 = scmp.ne.s32.totalorder %s72, %s75
      %p81 = scmp.eq.s32.totalorder %s15, 0
      %p82 = por %p80, %p81
      %p83 = scmp.ne.s32.totalorder %s72, %s75
      %p84 = scmp.eq.s32.totalorder %s20, 1
      %p85 = por %p83, %p84
      %p86 = scmp.ne.s32.totalorder %s75, %s76
      %p87 = scmp.eq.s32.totalorder %s20, 0
      %p88 = por %p86, %p87
      %p89 = scmp.ne.s32.totalorder %s75, %s76
      %p90 = scmp.eq.s32.totalorder %s21, 1
      %p91 = por %p89, %p90
      %p93 = scmp.ne.s32.totalorder %s76, %s92
      %p94 = scmp.eq.s32.totalorder %s21, 0
      %p95 = por %p93, %p94
      %p96 = scmp.le.s32.totalorder 1, %s15
      %p97 = scmp.lt.s32.totalorder %s15, 3
      %p98 = pnand %p96, %p97
      %p99 = pneg %p98
      // Predicated region
      $region9: #{circular_conv3d.1} parent=5 // pred_check
        _
      $region10: #{circular_conv3d.1} parent=5 // pred_check_branch
        %101 = sbr.rel (%p98) target = $region12
      $region11: #{circular_conv3d.1} parent=5 // pred_region
        %s102 = ssub.s32 %s15, 1
        // Predicated region
        $region13: #{circular_conv3d.1} parent=11 // pred_check
          %p103 = pneg %p36
        $region14: #{circular_conv3d.1} parent=11 // pred_check_branch
          %105 = sbr.rel (%p103) target = $region16
        $region15: #{circular_conv3d.1} parent=11 // pred_region
          %s107 = ssub.s32 16, 16
          %108 = vsyncadd [#allocation5], %s107
          %s110 = sshll.u32 %s0, 4
          %s111 = int_to_ptr.vmem [resolvable:$true] %s110
          %113 = dma.vmem_to_smem %s111, 16, [#allocation2], [#allocation5]
        $region16: #{circular_conv3d.1} parent=11 // pred_fallthru
          _
      $region12: #{circular_conv3d.1} parent=5 // pred_fallthru
        _
      %p114 = scmp.lt.s32.totalorder %s15, 2
      // Predicated region
      $region17: #{circular_conv3d.1} parent=5 // pred_check
        %p115 = pneg %p114
      $region18: #{circular_conv3d.1} parent=5 // pred_check_branch
        %117 = sbr.rel (%p115) target = $region20
      $region19: #{circular_conv3d.1} parent=5 // pred_region
        // Predicated region
        $region21: #{circular_conv3d.1} parent=19 // pred_check
          %p118 = pneg %p56
        $region22: #{circular_conv3d.1} parent=19 // pred_check_branch
          %120 = sbr.rel (%p118) target = $region24
        $region23: #{circular_conv3d.1} parent=19 // pred_region
          %s121 = sand.u32 %s46, 1
          %s122 = scalar_lea.sflag [#allocation3], %s121
          %s123 = sand.u32 %s46, 1
          %s124 = smul.addr %s123, 64
          %s125 = scalar_lea.vmem [#allocation6], %s124
          %s127 = ssub.s32 1024, 1024
          %128 = vsyncadd %s122, %s127
          %s129 = smul.addr %s15, 8
          %s130 = smul.addr %s129, 128
          %s131 = scalar_lea.hbm %s1, %s130
          %s132 = sshll.u32 %s125, 4
          %s133 = int_to_ptr.vmem [resolvable:$true] %s132
          %138 = dma.hbm_to_vmem [thread:$0]  %s131, 1024, %s133, %s122, 128, 128, 8
        $region24: #{circular_conv3d.1} parent=19 // pred_fallthru
          _
      $region20: #{circular_conv3d.1} parent=5 // pred_fallthru
        _
      %p139 = scmp.le.s32.totalorder 1, %s15
      %p140 = scmp.lt.s32.totalorder %s15, 3
      %p141 = pnand %p139, %p140
      %p142 = pneg %p141
      // Predicated region
      $region25: #{circular_conv3d.1} parent=5 // pred_check
        _
      $region26: #{circular_conv3d.1} parent=5 // pred_check_branch
        %144 = sbr.rel (%p141) target = $region28
      $region27: #{circular_conv3d.1} parent=5 // pred_region
        %s145 = ssub.s32 %s15, 1
        // Predicated region
        $region29: #{circular_conv3d.1} parent=27 // pred_check
          %p146 = pneg %p36
        $region30: #{circular_conv3d.1} parent=27 // pred_check_branch
          %148 = sbr.rel (%p146) target = $region32
        $region31: #{circular_conv3d.1} parent=27 // pred_region
          %149 = dma.done [#allocation5], 16
        $region32: #{circular_conv3d.1} parent=27 // pred_fallthru
          _
        %s150 = sand.u32 %s49, 1
        %s151 = scalar_lea.sflag [#allocation3], %s150
        %s152 = sand.u32 %s49, 1
        %s153 = smul.addr %s152, 64
        %s154 = scalar_lea.vmem [#allocation6], %s153
        // Predicated region
        $region33: #{circular_conv3d.1} parent=27 // pred_check
          %p155 = pneg %p62
        $region34: #{circular_conv3d.1} parent=27 // pred_check_branch
          %157 = sbr.rel (%p155) target = $region36
        $region35: #{circular_conv3d.1} parent=27 // pred_region
          %158 = dma.done %s151, 1024
        $region36: #{circular_conv3d.1} parent=27 // pred_fallthru
          _
        %159 = sfence
        %p160 = pneg %p36
        %p161 = pneg %p33
        %s162 = sand.u32 %s49, 1
        %s163 = scalar_lea.sflag [#allocation3], %s162
        %s164 = sand.u32 %s49, 1
        %s165 = smul.addr %s164, 64
        %s166 = scalar_lea.vmem [#allocation6], %s165
        %p167 = pneg %p62
        %p168 = pneg %p59
        %p169 = pneg %p88
        %p170 = pneg %p85
        %s171 = sand.u32 %s75, 1
        %s172 = scalar_lea.sflag [#allocation4], %s171
        %s173 = sand.u32 %s75, 1
        %s174 = smul.addr %s173, 64
        %s175 = scalar_lea.vmem [#allocation7], %s174
        %s176 = sld [smem:[#allocation2]]
        %s177 = sld [smem:[#allocation2 + $0x1]]
        %s178 = sld [smem:[#allocation2 + $0x2]]
        %s179 = sld [smem:[#allocation2 + $0x3]]
        %s180 = sld [smem:[#allocation2 + $0x4]]
        %s181 = sld [smem:[#allocation2 + $0x5]]
        %s182 = sld [smem:[#allocation2 + $0x6]]
        %s183 = sld [smem:[#allocation2 + $0x7]]
        %s184 = sld [smem:[#allocation2 + $0x8]]
        %s185 = sld [smem:[#allocation2 + $0x9]]
        %s186 = sld [smem:[#allocation2 + $0xa]]
        %s187 = sld [smem:[#allocation2 + $0xb]]
        %s188 = sld [smem:[#allocation2 + $0xc]]
        %s189 = sld [smem:[#allocation2 + $0xd]]
        %s190 = sld [smem:[#allocation2 + $0xe]]
        %s191 = sld [smem:[#allocation2 + $0xf]]
        %s192 = sld [smem:[#allocation2 + $0x10]]
        %s193 = sld [smem:[#allocation2 + $0x11]]
        %s194 = sld [smem:[#allocation2 + $0x12]]
        %s195 = sld [smem:[#allocation2 + $0x13]]
        %s196 = sld [smem:[#allocation2 + $0x14]]
        %s197 = sld [smem:[#allocation2 + $0x15]]
        %s198 = sld [smem:[#allocation2 + $0x16]]
        %s199 = sld [smem:[#allocation2 + $0x17]]
        %s200 = sld [smem:[#allocation2 + $0x18]]
        %s201 = sld [smem:[#allocation2 + $0x19]]
        %s202 = sld [smem:[#allocation2 + $0x1a]]
        %v203 = vld [vmem:[%s154] sm:$0xff]
        %204 = vrot.lane.b32.xlu0 %v203, 1
        %v205 = vpop.permute.xlu0 %204
        %v206 = vrot.slane %v205, 7
        %v207 = vstv %s176
        %v208 = vmul.f32 %v207, %v206
        %v209 = vstv %s185
        %v210 = vmul.f32 %v209, %v206
        %v211 = vstv %s194
        %v212 = vmul.f32 %v211, %v206
        %v213 = vstv %s179
        %v214 = vmul.f32 %v213, %v205
        %v215 = vadd.f32 %v208, %v214
        %v216 = vstv %s188
        %v217 = vmul.f32 %v216, %v205
        %v218 = vadd.f32 %v210, %v217
        %v219 = vstv %s197
        %v220 = vmul.f32 %v219, %v205
        %v221 = vadd.f32 %v212, %v220
        %v222 = vrot.slane %v205, 1
        %v223 = vstv %s182
        %v224 = vmul.f32 %v223, %v222
        %v225 = vadd.f32 %v215, %v224
        %v226 = vstv %s191
        %v227 = vmul.f32 %v226, %v222
        %v228 = vadd.f32 %v218, %v227
        %v229 = vstv %s200
        %v230 = vmul.f32 %v229, %v222
        %v231 = vadd.f32 %v221, %v230
        %v232 = vrot.slane %v203, 7
        %v233 = vstv %s177
        %v234 = vmul.f32 %v233, %v232
        %v235 = vadd.f32 %v225, %v234
        %v236 = vstv %s186
        %v237 = vmul.f32 %v236, %v232
        %v238 = vadd.f32 %v228, %v237
        %v239 = vstv %s195
        %v240 = vmul.f32 %v239, %v232
        %v241 = vadd.f32 %v231, %v240
        %v242 = vstv %s180
        %v243 = vmul.f32 %v242, %v203
        %v244 = vadd.f32 %v235, %v243
        %v245 = vstv %s189
        %v246 = vmul.f32 %v245, %v203
        %v247 = vadd.f32 %v238, %v246
        %v248 = vstv %s198
        %v249 = vmul.f32 %v248, %v203
        %v250 = vadd.f32 %v241, %v249
        %v251 = vrot.slane %v203, 1
        %v252 = vstv %s183
        %v253 = vmul.f32 %v252, %v251
        %v254 = vadd.f32 %v244, %v253
        %v255 = vstv %s192
        %v256 = vmul.f32 %v255, %v251
        %v257 = vadd.f32 %v247, %v256
        %v258 = vstv %s201
        %v259 = vmul.f32 %v258, %v251
        %v260 = vadd.f32 %v250, %v259
        %261 = vrot.lane.b32.xlu0 %v203, 127
        %v262 = vpop.permute.xlu0 %261
        %v263 = vrot.slane %v262, 7
        %v264 = vstv %s178
        %v265 = vmul.f32 %v264, %v263
        %v266 = vadd.f32 %v254, %v265
        %v267 = vstv %s187
        %v268 = vmul.f32 %v267, %v263
        %v269 = vadd.f32 %v257, %v268
        %v270 = vstv %s196
        %v271 = vmul.f32 %v270, %v263
        %v272 = vadd.f32 %v260, %v271
        %v273 = vstv %s181
        %v274 = vmul.f32 %v273, %v262
        %v275 = vadd.f32 %v266, %v274
        %v276 = vstv %s190
        %v277 = vmul.f32 %v276, %v262
        %v278 = vadd.f32 %v269, %v277
        %v279 = vstv %s199
        %v280 = vmul.f32 %v279, %v262
        %v281 = vadd.f32 %v272, %v280
        %v282 = vrot.slane %v262, 1
        %v283 = vstv %s184
        %v284 = vmul.f32 %v283, %v282
        %v285 = vadd.f32 %v275, %v284
        %v286 = vstv %s193
        %v287 = vmul.f32 %v286, %v282
        %v288 = vadd.f32 %v278, %v287
        %v289 = vstv %s202
        %v290 = vmul.f32 %v289, %v282
        %v291 = vadd.f32 %v281, %v290
        %s292 = scalar_lea.vmem %s154, 8 [#allocation6]
        %v293 = vld [vmem:[%s292] sm:$0xff]
        %294 = vrot.lane.b32.xlu0 %v293, 1
        %v295 = vpop.permute.xlu0 %294
        %v296 = vrot.slane %v295, 7
        %v297 = vmul.f32 %v207, %v296
        %v298 = vmul.f32 %v209, %v296
        %v299 = vadd.f32 %v285, %v298
        %v300 = vmul.f32 %v211, %v296
        %v301 = vadd.f32 %v288, %v300
        %v302 = vmul.f32 %v213, %v295
        %v303 = vadd.f32 %v297, %v302
        %v304 = vmul.f32 %v216, %v295
        %v305 = vadd.f32 %v299, %v304
        %v306 = vmul.f32 %v219, %v295
        %v307 = vadd.f32 %v301, %v306
        %v308 = vrot.slane %v295, 1
        %v309 = vmul.f32 %v223, %v308
        %v310 = vadd.f32 %v303, %v309
        %v311 = vmul.f32 %v226, %v308
        %v312 = vadd.f32 %v305, %v311
        %v313 = vmul.f32 %v229, %v308
        %v314 = vadd.f32 %v307, %v313
        %v315 = vrot.slane %v293, 7
        %v316 = vmul.f32 %v233, %v315
        %v317 = vadd.f32 %v310, %v316
        %v318 = vmul.f32 %v236, %v315
        %v319 = vadd.f32 %v312, %v318
        %v320 = vmul.f32 %v239, %v315
        %v321 = vadd.f32 %v314, %v320
        %v322 = vmul.f32 %v242, %v293
        %v323 = vadd.f32 %v317, %v322
        %v324 = vmul.f32 %v245, %v293
        %v325 = vadd.f32 %v319, %v324
        %v326 = vmul.f32 %v248, %v293
        %v327 = vadd.f32 %v321, %v326
        %v328 = vrot.slane %v293, 1
        %v329 = vmul.f32 %v252, %v328
        %v330 = vadd.f32 %v323, %v329
        %v331 = vmul.f32 %v255, %v328
        %v332 = vadd.f32 %v325, %v331
        %v333 = vmul.f32 %v258, %v328
        %v334 = vadd.f32 %v327, %v333
        %335 = vrot.lane.b32.xlu0 %v293, 127
        %v336 = vpop.permute.xlu0 %335
        %v337 = vrot.slane %v336, 7
        %v338 = vmul.f32 %v264, %v337
        %v339 = vadd.f32 %v330, %v338
        %v340 = vmul.f32 %v267, %v337
        %v341 = vadd.f32 %v332, %v340
        %v342 = vmul.f32 %v270, %v337
        %v343 = vadd.f32 %v334, %v342
        %v344 = vmul.f32 %v273, %v336
        %v345 = vadd.f32 %v339, %v344
        %v346 = vmul.f32 %v276, %v336
        %v347 = vadd.f32 %v341, %v346
        %v348 = vmul.f32 %v279, %v336
        %v349 = vadd.f32 %v343, %v348
        %v350 = vrot.slane %v336, 1
        %v351 = vmul.f32 %v283, %v350
        %v352 = vadd.f32 %v345, %v351
        %v353 = vmul.f32 %v286, %v350
        %v354 = vadd.f32 %v347, %v353
        %v355 = vmul.f32 %v289, %v350
        %v356 = vadd.f32 %v349, %v355
        %s357 = scalar_lea.vmem %s154, 16 [#allocation6]
        %v358 = vld [vmem:[%s357] sm:$0xff]
        %359 = vrot.lane.b32.xlu0 %v358, 1
        %v360 = vpop.permute.xlu0 %359
        %v361 = vrot.slane %v360, 7
        %v362 = vmul.f32 %v207, %v361
        %v363 = vmul.f32 %v209, %v361
        %v364 = vadd.f32 %v352, %v363
        %v365 = vmul.f32 %v211, %v361
        %v366 = vadd.f32 %v354, %v365
        %v367 = vmul.f32 %v213, %v360
        %v368 = vadd.f32 %v362, %v367
        %v369 = vmul.f32 %v216, %v360
        %v370 = vadd.f32 %v364, %v369
        %v371 = vmul.f32 %v219, %v360
        %v372 = vadd.f32 %v366, %v371
        %v373 = vrot.slane %v360, 1
        %v374 = vmul.f32 %v223, %v373
        %v375 = vadd.f32 %v368, %v374
        %v376 = vmul.f32 %v226, %v373
        %v377 = vadd.f32 %v370, %v376
        %v378 = vmul.f32 %v229, %v373
        %v379 = vadd.f32 %v372, %v378
        %v380 = vrot.slane %v358, 7
        %v381 = vmul.f32 %v233, %v380
        %v382 = vadd.f32 %v375, %v381
        %v383 = vmul.f32 %v236, %v380
        %v384 = vadd.f32 %v377, %v383
        %v385 = vmul.f32 %v239, %v380
        %v386 = vadd.f32 %v379, %v385
        %v387 = vmul.f32 %v242, %v358
        %v388 = vadd.f32 %v382, %v387
        %v389 = vmul.f32 %v245, %v358
        %v390 = vadd.f32 %v384, %v389
        %v391 = vmul.f32 %v248, %v358
        %v392 = vadd.f32 %v386, %v391
        %v393 = vrot.slane %v358, 1
        %v394 = vmul.f32 %v252, %v393
        %v395 = vadd.f32 %v388, %v394
        %v396 = vmul.f32 %v255, %v393
        %v397 = vadd.f32 %v390, %v396
        %v398 = vmul.f32 %v258, %v393
        %v399 = vadd.f32 %v392, %v398
        %400 = vrot.lane.b32.xlu0 %v358, 127
        %v401 = vpop.permute.xlu0 %400
        %v402 = vrot.slane %v401, 7
        %v403 = vmul.f32 %v264, %v402
        %v404 = vadd.f32 %v395, %v403
        %v405 = vmul.f32 %v267, %v402
        %v406 = vadd.f32 %v397, %v405
        %v407 = vmul.f32 %v270, %v402
        %v408 = vadd.f32 %v399, %v407
        %v409 = vmul.f32 %v273, %v401
        %v410 = vadd.f32 %v404, %v409
        %v411 = vmul.f32 %v276, %v401
        %v412 = vadd.f32 %v406, %v411
        %v413 = vmul.f32 %v279, %v401
        %v414 = vadd.f32 %v408, %v413
        %v415 = vrot.slane %v401, 1
        %v416 = vmul.f32 %v283, %v415
        %v417 = vadd.f32 %v410, %v416
        %v418 = vmul.f32 %v286, %v415
        %v419 = vadd.f32 %v412, %v418
        %v420 = vmul.f32 %v289, %v415
        %v421 = vadd.f32 %v414, %v420
        %s422 = scalar_lea.vmem %s154, 24 [#allocation6]
        %v423 = vld [vmem:[%s422] sm:$0xff]
        %424 = vrot.lane.b32.xlu0 %v423, 1
        %v425 = vpop.permute.xlu0 %424
        %v426 = vrot.slane %v425, 7
        %v427 = vmul.f32 %v207, %v426
        %v428 = vmul.f32 %v209, %v426
        %v429 = vadd.f32 %v417, %v428
        %v430 = vmul.f32 %v211, %v426
        %v431 = vadd.f32 %v419, %v430
        %v432 = vmul.f32 %v213, %v425
        %v433 = vadd.f32 %v427, %v432
        %v434 = vmul.f32 %v216, %v425
        %v435 = vadd.f32 %v429, %v434
        %v436 = vmul.f32 %v219, %v425
        %v437 = vadd.f32 %v431, %v436
        %v438 = vrot.slane %v425, 1
        %v439 = vmul.f32 %v223, %v438
        %v440 = vadd.f32 %v433, %v439
        %v441 = vmul.f32 %v226, %v438
        %v442 = vadd.f32 %v435, %v441
        %v443 = vmul.f32 %v229, %v438
        %v444 = vadd.f32 %v437, %v443
        %v445 = vrot.slane %v423, 7
        %v446 = vmul.f32 %v233, %v445
        %v447 = vadd.f32 %v440, %v446
        %v448 = vmul.f32 %v236, %v445
        %v449 = vadd.f32 %v442, %v448
        %v450 = vmul.f32 %v239, %v445
        %v451 = vadd.f32 %v444, %v450
        %v452 = vmul.f32 %v242, %v423
        %v453 = vadd.f32 %v447, %v452
        %v454 = vmul.f32 %v245, %v423
        %v455 = vadd.f32 %v449, %v454
        %v456 = vmul.f32 %v248, %v423
        %v457 = vadd.f32 %v451, %v456
        %v458 = vrot.slane %v423, 1
        %v459 = vmul.f32 %v252, %v458
        %v460 = vadd.f32 %v453, %v459
        %v461 = vmul.f32 %v255, %v458
        %v462 = vadd.f32 %v455, %v461
        %v463 = vmul.f32 %v258, %v458
        %v464 = vadd.f32 %v457, %v463
        %465 = vrot.lane.b32.xlu0 %v423, 127
        %v466 = vpop.permute.xlu0 %465
        %v467 = vrot.slane %v466, 7
        %v468 = vmul.f32 %v264, %v467
        %v469 = vadd.f32 %v460, %v468
        %v470 = vmul.f32 %v267, %v467
        %v471 = vadd.f32 %v462, %v470
        %v472 = vmul.f32 %v270, %v467
        %v473 = vadd.f32 %v464, %v472
        %v474 = vmul.f32 %v273, %v466
        %v475 = vadd.f32 %v469, %v474
        %v476 = vmul.f32 %v276, %v466
        %v477 = vadd.f32 %v471, %v476
        %v478 = vmul.f32 %v279, %v466
        %v479 = vadd.f32 %v473, %v478
        %v480 = vrot.slane %v466, 1
        %v481 = vmul.f32 %v283, %v480
        %v482 = vadd.f32 %v475, %v481
        %v483 = vmul.f32 %v286, %v480
        %v484 = vadd.f32 %v477, %v483
        %v485 = vmul.f32 %v289, %v480
        %v486 = vadd.f32 %v479, %v485
        %s487 = scalar_lea.vmem %s154, 32 [#allocation6]
        %v488 = vld [vmem:[%s487] sm:$0xff]
        %489 = vrot.lane.b32.xlu0 %v488, 1
        %v490 = vpop.permute.xlu0 %489
        %v491 = vrot.slane %v490, 7
        %v492 = vmul.f32 %v207, %v491
        %v493 = vmul.f32 %v209, %v491
        %v494 = vadd.f32 %v482, %v493
        %v495 = vmul.f32 %v211, %v491
        %v496 = vadd.f32 %v484, %v495
        %v497 = vmul.f32 %v213, %v490
        %v498 = vadd.f32 %v492, %v497
        %v499 = vmul.f32 %v216, %v490
        %v500 = vadd.f32 %v494, %v499
        %v501 = vmul.f32 %v219, %v490
        %v502 = vadd.f32 %v496, %v501
        %v503 = vrot.slane %v490, 1
        %v504 = vmul.f32 %v223, %v503
        %v505 = vadd.f32 %v498, %v504
        %v506 = vmul.f32 %v226, %v503
        %v507 = vadd.f32 %v500, %v506
        %v508 = vmul.f32 %v229, %v503
        %v509 = vadd.f32 %v502, %v508
        %v510 = vrot.slane %v488, 7
        %v511 = vmul.f32 %v233, %v510
        %v512 = vadd.f32 %v505, %v511
        %v513 = vmul.f32 %v236, %v510
        %v514 = vadd.f32 %v507, %v513
        %v515 = vmul.f32 %v239, %v510
        %v516 = vadd.f32 %v509, %v515
        %v517 = vmul.f32 %v242, %v488
        %v518 = vadd.f32 %v512, %v517
        %v519 = vmul.f32 %v245, %v488
        %v520 = vadd.f32 %v514, %v519
        %v521 = vmul.f32 %v248, %v488
        %v522 = vadd.f32 %v516, %v521
        %v523 = vrot.slane %v488, 1
        %v524 = vmul.f32 %v252, %v523
        %v525 = vadd.f32 %v518, %v524
        %v526 = vmul.f32 %v255, %v523
        %v527 = vadd.f32 %v520, %v526
        %v528 = vmul.f32 %v258, %v523
        %v529 = vadd.f32 %v522, %v528
        %530 = vrot.lane.b32.xlu0 %v488, 127
        %v531 = vpop.permute.xlu0 %530
        %v532 = vrot.slane %v531, 7
        %v533 = vmul.f32 %v264, %v532
        %v534 = vadd.f32 %v525, %v533
        %v535 = vmul.f32 %v267, %v532
        %v536 = vadd.f32 %v527, %v535
        %v537 = vmul.f32 %v270, %v532
        %v538 = vadd.f32 %v529, %v537
        %v539 = vmul.f32 %v273, %v531
        %v540 = vadd.f32 %v534, %v539
        %v541 = vmul.f32 %v276, %v531
        %v542 = vadd.f32 %v536, %v541
        %v543 = vmul.f32 %v279, %v531
        %v544 = vadd.f32 %v538, %v543
        %v545 = vrot.slane %v531, 1
        %v546 = vmul.f32 %v283, %v545
        %v547 = vadd.f32 %v540, %v546
        %v548 = vmul.f32 %v286, %v545
        %v549 = vadd.f32 %v542, %v548
        %v550 = vmul.f32 %v289, %v545
        %v551 = vadd.f32 %v544, %v550
        %s552 = scalar_lea.vmem %s154, 40 [#allocation6]
        %v553 = vld [vmem:[%s552] sm:$0xff]
        %554 = vrot.lane.b32.xlu0 %v553, 1
        %v555 = vpop.permute.xlu0 %554
        %v556 = vrot.slane %v555, 7
        %v557 = vmul.f32 %v207, %v556
        %v558 = vmul.f32 %v209, %v556
        %v559 = vadd.f32 %v547, %v558
        %v560 = vmul.f32 %v211, %v556
        %v561 = vadd.f32 %v549, %v560
        %v562 = vmul.f32 %v213, %v555
        %v563 = vadd.f32 %v557, %v562
        %v564 = vmul.f32 %v216, %v555
        %v565 = vadd.f32 %v559, %v564
        %v566 = vmul.f32 %v219, %v555
        %v567 = vadd.f32 %v561, %v566
        %v568 = vrot.slane %v555, 1
        %v569 = vmul.f32 %v223, %v568
        %v570 = vadd.f32 %v563, %v569
        %v571 = vmul.f32 %v226, %v568
        %v572 = vadd.f32 %v565, %v571
        %v573 = vmul.f32 %v229, %v568
        %v574 = vadd.f32 %v567, %v573
        %v575 = vrot.slane %v553, 7
        %v576 = vmul.f32 %v233, %v575
        %v577 = vadd.f32 %v570, %v576
        %v578 = vmul.f32 %v236, %v575
        %v579 = vadd.f32 %v572, %v578
        %v580 = vmul.f32 %v239, %v575
        %v581 = vadd.f32 %v574, %v580
        %v582 = vmul.f32 %v242, %v553
        %v583 = vadd.f32 %v577, %v582
        %v584 = vmul.f32 %v245, %v553
        %v585 = vadd.f32 %v579, %v584
        %v586 = vmul.f32 %v248, %v553
        %v587 = vadd.f32 %v581, %v586
        %v588 = vrot.slane %v553, 1
        %v589 = vmul.f32 %v252, %v588
        %v590 = vadd.f32 %v583, %v589
        %v591 = vmul.f32 %v255, %v588
        %v592 = vadd.f32 %v585, %v591
        %v593 = vmul.f32 %v258, %v588
        %v594 = vadd.f32 %v587, %v593
        %595 = vrot.lane.b32.xlu0 %v553, 127
        %v596 = vpop.permute.xlu0 %595
        %v597 = vrot.slane %v596, 7
        %v598 = vmul.f32 %v264, %v597
        %v599 = vadd.f32 %v590, %v598
        %v600 = vmul.f32 %v267, %v597
        %v601 = vadd.f32 %v592, %v600
        %v602 = vmul.f32 %v270, %v597
        %v603 = vadd.f32 %v594, %v602
        %v604 = vmul.f32 %v273, %v596
        %v605 = vadd.f32 %v599, %v604
        %v606 = vmul.f32 %v276, %v596
        %v607 = vadd.f32 %v601, %v606
        %v608 = vmul.f32 %v279, %v596
        %v609 = vadd.f32 %v603, %v608
        %v610 = vrot.slane %v596, 1
        %v611 = vmul.f32 %v283, %v610
        %v612 = vadd.f32 %v605, %v611
        %v613 = vmul.f32 %v286, %v610
        %v614 = vadd.f32 %v607, %v613
        %v615 = vmul.f32 %v289, %v610
        %v616 = vadd.f32 %v609, %v615
        %s617 = scalar_lea.vmem %s154, 48 [#allocation6]
        %v618 = vld [vmem:[%s617] sm:$0xff]
        %619 = vrot.lane.b32.xlu0 %v618, 1
        %v620 = vpop.permute.xlu0 %619
        %v621 = vrot.slane %v620, 7
        %v622 = vmul.f32 %v207, %v621
        %v623 = vadd.f32 %v291, %v622
        %v624 = vmul.f32 %v209, %v621
        %v625 = vadd.f32 %v612, %v624
        %v626 = vmul.f32 %v211, %v621
        %v627 = vadd.f32 %v614, %v626
        %v628 = vmul.f32 %v213, %v620
        %v629 = vadd.f32 %v623, %v628
        %v630 = vmul.f32 %v216, %v620
        %v631 = vadd.f32 %v625, %v630
        %v632 = vmul.f32 %v219, %v620
        %v633 = vadd.f32 %v627, %v632
        %v634 = vrot.slane %v620, 1
        %v635 = vmul.f32 %v223, %v634
        %v636 = vadd.f32 %v629, %v635
        %v637 = vmul.f32 %v226, %v634
        %v638 = vadd.f32 %v631, %v637
        %v639 = vmul.f32 %v229, %v634
        %v640 = vadd.f32 %v633, %v639
        %v641 = vrot.slane %v618, 7
        %v642 = vmul.f32 %v233, %v641
        %v643 = vadd.f32 %v636, %v642
        %v644 = vmul.f32 %v236, %v641
        %v645 = vadd.f32 %v638, %v644
        %v646 = vmul.f32 %v239, %v641
        %v647 = vadd.f32 %v640, %v646
        %v648 = vmul.f32 %v242, %v618
        %v649 = vadd.f32 %v643, %v648
        %v650 = vmul.f32 %v245, %v618
        %v651 = vadd.f32 %v645, %v650
        %v652 = vmul.f32 %v248, %v618
        %v653 = vadd.f32 %v647, %v652
        %v654 = vrot.slane %v618, 1
        %v655 = vmul.f32 %v252, %v654
        %v656 = vadd.f32 %v649, %v655
        %v657 = vmul.f32 %v255, %v654
        %v658 = vadd.f32 %v651, %v657
        %v659 = vmul.f32 %v258, %v654
        %v660 = vadd.f32 %v653, %v659
        %661 = vrot.lane.b32.xlu0 %v618, 127
        %v662 = vpop.permute.xlu0 %661
        %v663 = vrot.slane %v662, 7
        %v664 = vmul.f32 %v264, %v663
        %v665 = vadd.f32 %v656, %v664
        %v666 = vmul.f32 %v267, %v663
        %v667 = vadd.f32 %v658, %v666
        %v668 = vmul.f32 %v270, %v663
        %v669 = vadd.f32 %v660, %v668
        %v670 = vmul.f32 %v273, %v662
        %v671 = vadd.f32 %v665, %v670
        %v672 = vmul.f32 %v276, %v662
        %v673 = vadd.f32 %v667, %v672
        %v674 = vmul.f32 %v279, %v662
        %v675 = vadd.f32 %v669, %v674
        %v676 = vrot.slane %v662, 1
        %v677 = vmul.f32 %v283, %v676
        %v678 = vadd.f32 %v671, %v677
        %v679 = vmul.f32 %v286, %v676
        %v680 = vadd.f32 %v673, %v679
        %v681 = vmul.f32 %v289, %v676
        %v682 = vadd.f32 %v675, %v681
        %s683 = scalar_lea.vmem %s154, 56 [#allocation6]
        %v684 = vld [vmem:[%s683] sm:$0xff]
        %685 = vrot.lane.b32.xlu0 %v684, 1
        %v686 = vpop.permute.xlu0 %685
        %v687 = vrot.slane %v686, 7
        %v688 = vmul.f32 %v207, %v687
        %v689 = vadd.f32 %v356, %v688
        %v690 = vmul.f32 %v209, %v687
        %v691 = vadd.f32 %v678, %v690
        %v692 = vmul.f32 %v211, %v687
        %v693 = vadd.f32 %v680, %v692
        %v694 = vmul.f32 %v213, %v686
        %v695 = vadd.f32 %v689, %v694
        %v696 = vmul.f32 %v216, %v686
        %v697 = vadd.f32 %v691, %v696
        %v698 = vmul.f32 %v219, %v686
        %v699 = vadd.f32 %v693, %v698
        %v700 = vrot.slane %v686, 1
        %v701 = vmul.f32 %v223, %v700
        %v702 = vadd.f32 %v695, %v701
        %v703 = vmul.f32 %v226, %v700
        %v704 = vadd.f32 %v697, %v703
        %v705 = vmul.f32 %v229, %v700
        %v706 = vadd.f32 %v699, %v705
        %v707 = vrot.slane %v684, 7
        %v708 = vmul.f32 %v233, %v707
        %v709 = vadd.f32 %v702, %v708
        %v710 = vmul.f32 %v236, %v707
        %v711 = vadd.f32 %v704, %v710
        %v712 = vmul.f32 %v239, %v707
        %v713 = vadd.f32 %v706, %v712
        %v714 = vmul.f32 %v242, %v684
        %v715 = vadd.f32 %v709, %v714
        %v716 = vmul.f32 %v245, %v684
        %v717 = vadd.f32 %v711, %v716
        %v718 = vmul.f32 %v248, %v684
        %v719 = vadd.f32 %v713, %v718
        %v720 = vrot.slane %v684, 1
        %v721 = vmul.f32 %v252, %v720
        %v722 = vadd.f32 %v715, %v721
        %v723 = vmul.f32 %v255, %v720
        %v724 = vadd.f32 %v717, %v723
        %v725 = vmul.f32 %v258, %v720
        %v726 = vadd.f32 %v719, %v725
        %727 = vrot.lane.b32.xlu0 %v684, 127
        %v728 = vpop.permute.xlu0 %727
        %v729 = vrot.slane %v728, 7
        %v730 = vmul.f32 %v264, %v729
        %v731 = vadd.f32 %v722, %v730
        %v732 = vmul.f32 %v267, %v729
        %v733 = vadd.f32 %v724, %v732
        %v734 = vmul.f32 %v270, %v729
        %v735 = vadd.f32 %v726, %v734
        %v736 = vmul.f32 %v273, %v728
        %v737 = vadd.f32 %v731, %v736
        %v738 = vmul.f32 %v276, %v728
        %v739 = vadd.f32 %v733, %v738
        %v740 = vmul.f32 %v279, %v728
        %v741 = vadd.f32 %v735, %v740
        %v742 = vrot.slane %v728, 1
        %v743 = vmul.f32 %v283, %v742
        %v744 = vadd.f32 %v737, %v743
        %v745 = vmul.f32 %v286, %v742
        %v746 = vadd.f32 %v739, %v745
        %v747 = vmul.f32 %v289, %v742
        %v748 = vadd.f32 %v741, %v747
        %749 = vst [vmem:[%s175] sm:$0xff] %v744
        %s750 = scalar_lea.vmem %s175, 8 [#allocation7]
        %751 = vst [vmem:[%s750] sm:$0xff] %v421
        %s752 = scalar_lea.vmem %s175, 16 [#allocation7]
        %753 = vst [vmem:[%s752] sm:$0xff] %v486
        %s754 = scalar_lea.vmem %s175, 24 [#allocation7]
        %755 = vst [vmem:[%s754] sm:$0xff] %v551
        %s756 = scalar_lea.vmem %s175, 32 [#allocation7]
        %757 = vst [vmem:[%s756] sm:$0xff] %v616
        %s758 = scalar_lea.vmem %s175, 40 [#allocation7]
        %759 = vst [vmem:[%s758] sm:$0xff] %v682
        %s760 = scalar_lea.vmem %s175, 48 [#allocation7]
        %761 = vst [vmem:[%s760] sm:$0xff] %v748
        %s762 = scalar_lea.vmem %s175, 56 [#allocation7]
        %763 = vst [vmem:[%s762] sm:$0xff] %v746
        %s764 = sand.u32 %s75, 1
        %s765 = scalar_lea.sflag [#allocation4], %s764
        %s766 = sand.u32 %s75, 1
        %s767 = smul.addr %s766, 64
        %s768 = scalar_lea.vmem [#allocation7], %s767
        // Predicated region
        $region37: #{circular_conv3d.1} parent=27 // pred_check
          %p769 = pneg %p85
        $region38: #{circular_conv3d.1} parent=27 // pred_check_branch
          %771 = sbr.rel (%p769) target = $region40
        $region39: #{circular_conv3d.1} parent=27 // pred_region
          %s773 = ssub.s32 1024, 1024
          %774 = vsyncadd %s765, %s773
          %s775 = smul.addr %s20, 8
          %s776 = smul.addr %s775, 128
          %s777 = scalar_lea.hbm %s2, %s776
          %s778 = sshll.u32 %s768, 4
          %s779 = int_to_ptr.vmem [resolvable:$true] %s778
          %784 = dma.vmem_to_hbm [thread:$0]  %s779, 1024, %s777, %s765, 128, 128, 8
        $region40: #{circular_conv3d.1} parent=27 // pred_fallthru
          _
      $region28: #{circular_conv3d.1} parent=5 // pred_fallthru
        _
      %p785 = scmp.le.s32.totalorder 2, %s15
      // Predicated region
      $region41: #{circular_conv3d.1} parent=5 // pred_check
        %p786 = pneg %p785
      $region42: #{circular_conv3d.1} parent=5 // pred_check_branch
        %788 = sbr.rel (%p786) target = $region44
      $region43: #{circular_conv3d.1} parent=5 // pred_region
        %s789 = ssub.s32 %s15, 2
        // Predicated region
        $region45: #{circular_conv3d.1} parent=43 // pred_check
          %p790 = pneg %p91
        $region46: #{circular_conv3d.1} parent=43 // pred_check_branch
          %792 = sbr.rel (%p790) target = $region48
        $region47: #{circular_conv3d.1} parent=43 // pred_region
          %s793 = sand.u32 %s76, 1
          %s794 = scalar_lea.sflag [#allocation4], %s793
          %s795 = sand.u32 %s76, 1
          %s796 = smul.addr %s795, 64
          %s797 = scalar_lea.vmem [#allocation7], %s796
          %798 = dma.done %s794, 1024
        $region48: #{circular_conv3d.1} parent=43 // pred_fallthru
          _
      $region44: #{circular_conv3d.1} parent=5 // pred_fallthru
        _
    $region6: #{circular_conv3d.1} parent=1 // loop_footer
      %s19 = sadd.s32 1, %s15
    $region7: #{circular_conv3d.1} parent=1 // loop_footer_branch
      %14 = sbr.rel target = $region3
    $region8: #{circular_conv3d.1} parent=1 // loop_exit
      _
    %799 = vsyncpa [#allocation3], 1
    %s800 = scalar_lea.sflag [#allocation3], 1
    %801 = vsyncpa %s800, 1
    %802 = vsyncpa [#allocation4], 1
    %s803 = scalar_lea.sflag [#allocation4], 1
    %804 = vsyncpa %s803, 1
    %805 = vsyncpa [#allocation5], 1
    %s806 = scalar_lea.sflag [#allocation5], 1
    %807 = vsyncpa %s806, 1

</llo_original>
